<compile_context>
chip_gen: v7x
topology: tpu7x:2x2x1
jax: 0.10.0
libtpu: 0.0.40
codegen_flags: <defaults>
</compile_context>

<pallas_src>
import jax
import jax.numpy as jnp
from jax.experimental import pallas as pl
from jax.experimental.pallas import tpu as pltpu


# ---------------------------------------------------------------------------
# Fused kernel: embedding + full LSTM stack, one batch shard per grid step.
# ---------------------------------------------------------------------------
def _make_mbrnn_kernel(*, sl, bsh, ntoken, layer_dims, matmul_dtype):
    n_layers = len(layer_dims)

    def kernel(*refs):
        ids_ref, emb_ref = refs[0], refs[1]           # (bsh,sl,1) i32 ; (ntoken,emb) bf16
        w_refs = refs[2:2 + 3 * n_layers]
        out_refs = refs[2 + 3 * n_layers:]            # per-layer (bsh, sl, nh) bf16

        # ---- embedding: ONE batched one-hot matmul for all bsh*sl tokens -------------
        # Exact gather: exactly one 1.0 per row against a bf16 table, f32 accumulation.
        # TODO(synk): for realistic vocab (60k x 400 bf16 ~ 48 MiB) replace with a
        # scalar-prefetch + HBM row-gather DMA; the table cannot live in VMEM.
        ids = ids_ref[...].reshape(bsh * sl, 1)                         # (bsh*sl, 1), (b,t) order
        lane_iota = jax.lax.broadcasted_iota(jnp.int32, (bsh * sl, ntoken), 1)
        onehot = (lane_iota == ids).astype(matmul_dtype)                # (bsh*sl, ntoken)
        x_all = jnp.dot(onehot, emb_ref[...],
                        preferred_element_type=jnp.float32)            # (bsh*sl, emb) f32
        x_all = x_all.astype(matmul_dtype)

        for l, (_ni, nh) in enumerate(layer_dims):
            w_ih_t = w_refs[3 * l][...]                                 # (ni, 4nh) bf16
            w_hh_t = w_refs[3 * l + 1][...]                             # (nh, 4nh) bf16
            bias = w_refs[3 * l + 2][...]                               # (1, 4nh) f32
            out_ref = out_refs[l]

            # Time-batched input projection (+ folded bias): one big MXU matmul per
            # layer; the bias broadcast happens once, not once per timestep.
            xproj = jnp.dot(x_all, w_ih_t,
                            preferred_element_type=jnp.float32) + bias  # (bsh*sl, 4nh) f32
            xproj = xproj.reshape(bsh, sl, 4 * nh)

            # Recurrence: only h @ W_hh stays inside the loop.  Fully unrolled
            # (static indices, LLO visibility) -- sl is small here.
            # TODO(synk): for realistic sl (70-512) / nh (~1150) time-chunk with a grid
            # axis marked "arbitrary" carrying h/c in VMEM scratch (v7x has 64 MiB).
            # TODO(synk): hold W_hh weight-stationary via pltpu.matmul_push_rhs /
            # matmul_acc_lhs to avoid re-pushing the RHS every timestep.
            # TODO(synk): pad nh to a multiple of 128 so the gate slices below land on
            # lane-tile boundaries at realistic sizes (1150 -> 1152).
            h = jnp.zeros((bsh, nh), jnp.float32)
            c = jnp.zeros((bsh, nh), jnp.float32)
            for t in range(sl):
                gates = xproj[:, t, :] + jnp.dot(
                    h.astype(matmul_dtype), w_hh_t,
                    preferred_element_type=jnp.float32)                 # (bsh, 4nh) f32
                i_g = jax.nn.sigmoid(gates[:, 0 * nh:1 * nh])
                f_g = jax.nn.sigmoid(gates[:, 1 * nh:2 * nh])
                g_g = jnp.tanh(gates[:, 2 * nh:3 * nh])
                o_g = jax.nn.sigmoid(gates[:, 3 * nh:4 * nh])
                c = f_g * c + i_g * g_g
                h = o_g * jnp.tanh(c)
                out_ref[:, t, :] = h.astype(out_ref.dtype)              # bf16 store, VMEM tile

            # Next layer reads this layer's full sequence (still VMEM-resident).  The
            # bf16 round-trip is numerically identical to the bf16 cast the next
            # matmul would perform anyway.
            x_all = out_ref[...].reshape(bsh * sl, nh).astype(matmul_dtype)

    return kernel


def _pick_vmem_limit():
    """Generation-aware VMEM budget (review: do not hard-code 32 MiB)."""
    cap = None
    try:
        info = pltpu.get_tpu_info()
        cap = getattr(info, "vmem_capacity_bytes", None)
    except Exception:
        cap = None
    if not cap:
        cap = 64 * 1024 * 1024          # conservative: v7x per-core VMEM
    return int(min(cap * 3 // 4, 112 * 1024 * 1024))


def multibatch_rnn_forward(input_ids, params, *, bptt, max_seq,
                           matmul_dtype=jnp.bfloat16):
    """Eval-mode MultiBatchRNN.forward.

    input_ids: (sl, bs) int token ids.
    Returns (raw_outputs, outputs): lists (one per LSTM layer) of (sl_kept, bs, nh_l)
    float32 arrays; sl_kept follows the bptt/max_seq chunk filter of the module.
    """
    sl, bs = input_ids.shape
    emb_tab = params["emb"].astype(matmul_dtype)            # MXU-fed table (bf16)
    ntoken = emb_tab.shape[0]
    layer_ps = params["layers"]

    # Wrapper-side parameter prep (fold in f32 first, then cast): pre-transposed
    # weights, single folded bias per layer, bf16 matmul operands.
    flat_params, layer_dims = [], []
    for lp in layer_ps:
        nh = lp["w_hh"].shape[1]
        ni = lp["w_ih"].shape[1]
        layer_dims.append((ni, nh))
        flat_params += [
            lp["w_ih"].T.astype(matmul_dtype),                                  # (ni, 4nh)
            lp["w_hh"].T.astype(matmul_dtype),                                  # (nh, 4nh)
            (lp["b_ih"] + lp["b_hh"]).astype(jnp.float32).reshape(1, 4 * nh),   # (1, 4nh)
        ]

    # Batch-parallel grid: independent sequences, so the recurrence stays intact per
    # shard.  Uses the second TensorCore on v7x; near-no-op on v5e/v6e.
    n_shards = 2 if (bs % 2 == 0 and bs >= 2) else 1
    bsh = bs // n_shards

    # Batch-major layout so the batch shard is a *leading*-dim block: every BlockSpec
    # keeps its last-two dims equal to the full array dims (satisfies (8,128) rules).
    ids_bm = jnp.transpose(input_ids.astype(jnp.int32), (1, 0)).reshape(bs, sl, 1)

    kernel = _make_mbrnn_kernel(sl=sl, bsh=bsh, ntoken=ntoken,
                                layer_dims=tuple(layer_dims),
                                matmul_dtype=matmul_dtype)

    def rep_spec(shape):
        return pl.BlockSpec(shape, lambda b: (0,) * len(shape))

    in_specs = ([pl.BlockSpec((bsh, sl, 1), lambda b: (b, 0, 0)),
                 rep_spec(emb_tab.shape)]
                + [rep_spec(a.shape) for a in flat_params])
    out_shape = tuple(jax.ShapeDtypeStruct((bs, sl, nh), jnp.bfloat16)
                      for _, nh in layer_dims)
    out_specs = tuple(pl.BlockSpec((bsh, sl, nh), lambda b: (b, 0, 0))
                      for _, nh in layer_dims)

    outs = pl.pallas_call(
        kernel,
        out_shape=out_shape,
        grid=(n_shards,),
        in_specs=in_specs,
        out_specs=out_specs,
        compiler_params=pltpu.CompilerParams(
            dimension_semantics=("parallel",),
            vmem_limit_bytes=_pick_vmem_limit()),
    )(ids_bm, emb_tab, *flat_params)

    # MultiBatchRNN chunk filter: a bptt chunk starting at i is kept iff i > sl - max_seq.
    # Hidden state carries across *all* chunks, so the concatenation of the kept chunks
    # equals a trailing time-slice of the full-sequence outputs.
    kept_starts = [i for i in range(0, sl, bptt) if i > sl - max_seq]
    assert kept_starts, "max_seq too small: no bptt chunk kept"
    keep_from = kept_starts[0]

    # Back to the module's (sl, bs, nh) layout and f32 interface dtype.
    outputs = [jnp.transpose(o, (1, 0, 2)).astype(jnp.float32)[keep_from:] for o in outs]
    # TODO(synk): training-mode dropouts (EmbeddingDropout, LockedDropout, WeightDrop)
    # are identity in eval and are not implemented; hence raw_outputs == outputs here.
    raw_outputs = list(outputs)
    return raw_outputs, outputs


# ---------------------------------------------------------------------------
# Pure-JAX reference mirroring the PyTorch control flow literally:
# bptt chunk loop, hidden-state carry, max_seq filter, per-chunk concat.
# Same precision policy as the kernel (bf16 matmul operands, f32 gate math).
# ---------------------------------------------------------------------------
def reference_forward(input_ids, params, *, bptt, max_seq,
                      matmul_dtype=jnp.bfloat16):
    sl, bs = input_ids.shape
    emb_tab = params["emb"].astype(matmul_dtype)
    layer_ps = params["layers"]
    n_layers = len(layer_ps)

    hidden = [(jnp.zeros((bs, lp["w_hh"].shape[1]), jnp.float32),
               jnp.zeros((bs, lp["w_hh"].shape[1]), jnp.float32))
              for lp in layer_ps]

    def encoder_chunk(chunk_ids, hidden):
        raw_output = jnp.take(emb_tab, chunk_ids, axis=0).astype(jnp.float32)
        raw_outputs, outputs, new_hidden = [], [], []
        for l, lp in enumerate(layer_ps):
            nh = lp["w_hh"].shape[1]
            w_ih_t = lp["w_ih"].T.astype(matmul_dtype)
            w_hh_t = lp["w_hh"].T.astype(matmul_dtype)
            bias = (lp["b_ih"] + lp["b_hh"]).astype(jnp.float32).reshape(1, 4 * nh)
            h, c = hidden[l]
            hs = []
            for t in range(raw_output.shape[0]):
                x_t = raw_output[t]
                gates = (jnp.dot(x_t.astype(matmul_dtype), w_ih_t,
                                 preferred_element_type=jnp.float32) + bias
                         + jnp.dot(h.astype(matmul_dtype), w_hh_t,
                                   preferred_element_type=jnp.float32))
                i_g = jax.nn.sigmoid(gates[:, 0 * nh:1 * nh])
                f_g = jax.nn.sigmoid(gates[:, 1 * nh:2 * nh])
                g_g = jnp.tanh(gates[:, 2 * nh:3 * nh])
                o_g = jax.nn.sigmoid(gates[:, 3 * nh:4 * nh])
                c = f_g * c + i_g * g_g
                h = o_g * jnp.tanh(c)
                hs.append(h)
            raw_output = jnp.stack(hs, axis=0)
            new_hidden.append((h, c))
            raw_outputs.append(raw_output)
            outputs.append(raw_output)          # dropouth is identity in eval mode
        return raw_outputs, outputs, new_hidden

    kept_raw, kept_out = [], []
    for i in range(0, sl, bptt):
        r, o, hidden = encoder_chunk(input_ids[i:min(i + bptt, sl)], hidden)
        if i > sl - max_seq:
            kept_raw.append(r)
            kept_out.append(o)

    raw_cat = [jnp.concatenate([ch[l] for ch in kept_raw], axis=0) for l in range(n_layers)]
    out_cat = [jnp.concatenate([ch[l] for ch in kept_out], axis=0) for l in range(n_layers)]
    return raw_cat, out_cat


# ---------------------------------------------------------------------------
# Deterministic parameter init (PyTorch-LSTM-like layout and scales)
# ---------------------------------------------------------------------------
def init_params(key, ntoken, emb_sz, n_hid, n_layers):
    keys = jax.random.split(key, 1 + 4 * n_layers)
    params = dict(
        emb=jax.random.uniform(keys[0], (ntoken, emb_sz), jnp.float32, -0.1, 0.1),
        layers=[],
    )
    k = 1
    for l in range(n_layers):
        ni = emb_sz if l == 0 else n_hid
        nh = n_hid if l != n_layers - 1 else emb_sz    # fastai: last layer back to emb_sz
        s = nh ** -0.5
        params["layers"].append(dict(
            w_ih=jax.random.uniform(keys[k + 0], (4 * nh, ni), jnp.float32, -s, s),
            w_hh=jax.random.uniform(keys[k + 1], (4 * nh, nh), jnp.float32, -s, s),
            b_ih=jax.random.uniform(keys[k + 2], (4 * nh,), jnp.float32, -s, s),
            b_hh=jax.random.uniform(keys[k + 3], (4 * nh,), jnp.float32, -s, s),
        ))
        k += 4
    return params


if __name__ == "__main__":
    key = jax.random.PRNGKey(0)
    sl, bs = 8, 2
    ntoken, emb_sz, n_hid, n_layers = 64, 32, 32, 2     # 4*nh = 128 -> lane-dense gates
    bptt, max_seq = 4, 6                                # keeps the chunk starting at t=4

    k_ids, k_par = jax.random.split(key)
    input_ids = jax.random.randint(k_ids, (sl, bs), 0, ntoken, dtype=jnp.int32)
    params = init_params(k_par, ntoken, emb_sz, n_hid, n_layers)

    raw_outputs, outputs = multibatch_rnn_forward(input_ids, params,
                                                  bptt=bptt, max_seq=max_seq)
    jax.block_until_ready((raw_outputs, outputs))

    ref_raw, ref_out = reference_forward(input_ids, params, bptt=bptt, max_seq=max_seq)

    sl_kept = sl - 4                                     # chunks kept: start=4 only
    assert len(outputs) == n_layers and len(raw_outputs) == n_layers
    for l in range(n_layers):
        nh = params["layers"][l]["w_hh"].shape[1]
        assert outputs[l].shape == (sl_kept, bs, nh), outputs[l].shape
        assert outputs[l].shape == ref_out[l].shape
        # kernel stores the layer sequences in bf16 (then upcasts) -> 1e-2 tolerance
        assert jnp.allclose(outputs[l], ref_out[l], atol=1e-2, rtol=1e-2), \
            f"layer {l} outputs mismatch vs JAX reference"
        assert jnp.allclose(raw_outputs[l], ref_raw[l], atol=1e-2, rtol=1e-2), \
            f"layer {l} raw_outputs mismatch vs JAX reference"
    print("KERNEL_OK")
</pallas_src>

<mosaic_0001>
module attributes {stable_mosaic.version = 11 : i64} {
  func.func @kernel(%arg0: i32, %arg1: memref<1x8x1xi32, #tpu.memory_space<vmem>>, %arg2: memref<64x32xbf16, #tpu.memory_space<vmem>>, %arg3: memref<32x128xbf16, #tpu.memory_space<vmem>>, %arg4: memref<32x128xbf16, #tpu.memory_space<vmem>>, %arg5: memref<1x128xf32, #tpu.memory_space<vmem>>, %arg6: memref<32x128xbf16, #tpu.memory_space<vmem>>, %arg7: memref<32x128xbf16, #tpu.memory_space<vmem>>, %arg8: memref<1x128xf32, #tpu.memory_space<vmem>>, %arg9: memref<1x8x32xbf16, #tpu.memory_space<vmem>>, %arg10: memref<1x8x32xbf16, #tpu.memory_space<vmem>>) attributes {dimension_semantics = [#tpu.dimension_semantics<parallel>], iteration_bounds = array<i64: 2>, scalar_prefetch = 0 : i64, scratch_operands = 0 : i64, tpu.core_type = #tpu.core_type<tc>, window_params = [{transform_indices = @transform_0, window_bounds = array<i64: 1, 8, 1>}, {pipeline_mode = #tpu.pipeline_mode<synchronous>, transform_indices = @transform_1, window_bounds = array<i64: 64, 32>}, {pipeline_mode = #tpu.pipeline_mode<synchronous>, transform_indices = @transform_2, window_bounds = array<i64: 32, 128>}, {pipeline_mode = #tpu.pipeline_mode<synchronous>, transform_indices = @transform_3, window_bounds = array<i64: 32, 128>}, {pipeline_mode = #tpu.pipeline_mode<synchronous>, transform_indices = @transform_4, window_bounds = array<i64: 1, 128>}, {pipeline_mode = #tpu.pipeline_mode<synchronous>, transform_indices = @transform_5, window_bounds = array<i64: 32, 128>}, {pipeline_mode = #tpu.pipeline_mode<synchronous>, transform_indices = @transform_6, window_bounds = array<i64: 32, 128>}, {pipeline_mode = #tpu.pipeline_mode<synchronous>, transform_indices = @transform_7, window_bounds = array<i64: 1, 128>}, {transform_indices = @transform_8, window_bounds = array<i64: 1, 8, 32>}, {transform_indices = @transform_9, window_bounds = array<i64: 1, 8, 32>}]} {
    %c0 = arith.constant 0 : index
    %c0_0 = arith.constant 0 : index
    %c0_1 = arith.constant 0 : index
    %0 = vector.load %arg1[%c0, %c0_0, %c0_1] : memref<1x8x1xi32, #tpu.memory_space<vmem>>, vector<1x8x1xi32>
    %1 = vector.shape_cast %0 : vector<1x8x1xi32> to vector<8x1xi32>
    %2 = tpu.iota {dimensions = array<i32: 1>} : vector<8x64xi32>
    %3 = vector.broadcast %1 : vector<8x1xi32> to vector<8x64xi32>
    %4 = arith.cmpi eq, %2, %3 : vector<8x64xi32>
    %5 = arith.extui %4 : vector<8x64xi1> to vector<8x64xi32>
    %6 = arith.sitofp %5 : vector<8x64xi32> to vector<8x64xf32>
    %7 = arith.truncf %6 : vector<8x64xf32> to vector<8x64xbf16>
    %c0_2 = arith.constant 0 : index
    %c0_3 = arith.constant 0 : index
    %8 = vector.load %arg2[%c0_2, %c0_3] : memref<64x32xbf16, #tpu.memory_space<vmem>>, vector<64x32xbf16>
    %cst = arith.constant dense<0.000000e+00> : vector<8x32xf32>
    %9 = tpu.matmul %7, %8, %cst {dimension_numbers = #tpu.dot_dimension_numbers<[1], [0], [0], [1], [0, 0, 1, 1], [], []>} : vector<8x64xbf16>, vector<64x32xbf16>, vector<8x32xf32> -> vector<8x32xf32>
    %10 = arith.truncf %9 : vector<8x32xf32> to vector<8x32xbf16>
    %c0_4 = arith.constant 0 : index
    %c0_5 = arith.constant 0 : index
    %11 = vector.load %arg3[%c0_4, %c0_5] : memref<32x128xbf16, #tpu.memory_space<vmem>>, vector<32x128xbf16>
    %c0_6 = arith.constant 0 : index
    %c0_7 = arith.constant 0 : index
    %12 = vector.load %arg4[%c0_6, %c0_7] : memref<32x128xbf16, #tpu.memory_space<vmem>>, vector<32x128xbf16>
    %c0_8 = arith.constant 0 : index
    %c0_9 = arith.constant 0 : index
    %13 = vector.load %arg5[%c0_8, %c0_9] : memref<1x128xf32, #tpu.memory_space<vmem>>, vector<1x128xf32>
    %cst_10 = arith.constant dense<0.000000e+00> : vector<8x128xf32>
    %14 = tpu.matmul %10, %11, %cst_10 {dimension_numbers = #tpu.dot_dimension_numbers<[1], [0], [0], [1], [0, 0, 1, 1], [], []>} : vector<8x32xbf16>, vector<32x128xbf16>, vector<8x128xf32> -> vector<8x128xf32>
    %15 = vector.broadcast %13 : vector<1x128xf32> to vector<8x128xf32>
    %16 = arith.addf %14, %15 : vector<8x128xf32>
    %17 = vector.shape_cast %16 : vector<8x128xf32> to vector<1x8x128xf32>
    %cst_11 = arith.constant 0.000000e+00 : f32
    %18 = vector.broadcast %cst_11 : f32 to vector<1x32xf32>
    %cst_12 = arith.constant 0.000000e+00 : f32
    %19 = vector.broadcast %cst_12 : f32 to vector<1x32xf32>
    %20 = vector.extract_strided_slice %17 {offsets = [0, 0, 0], sizes = [1, 1, 128], strides = [1, 1, 1]} : vector<1x8x128xf32> to vector<1x1x128xf32>
    %21 = vector.shape_cast %20 : vector<1x1x128xf32> to vector<1x128xf32>
    %22 = arith.truncf %18 : vector<1x32xf32> to vector<1x32xbf16>
    %cst_13 = arith.constant dense<0.000000e+00> : vector<1x128xf32>
    %23 = tpu.matmul %22, %12, %cst_13 {dimension_numbers = #tpu.dot_dimension_numbers<[1], [0], [0], [1], [0, 0, 1, 1], [], []>} : vector<1x32xbf16>, vector<32x128xbf16>, vector<1x128xf32> -> vector<1x128xf32>
    %24 = arith.addf %21, %23 : vector<1x128xf32>
    %25 = vector.extract_strided_slice %24 {offsets = [0, 0], sizes = [1, 32], strides = [1, 1]} : vector<1x128xf32> to vector<1x32xf32>
    %26 = arith.negf %25 : vector<1x32xf32>
    %27 = math.exp %26 : vector<1x32xf32>
    %cst_14 = arith.constant 1.000000e+00 : f32
    %28 = vector.broadcast %cst_14 : f32 to vector<1x32xf32>
    %29 = arith.addf %28, %27 : vector<1x32xf32>
    %30 = arith.divf %28, %29 : vector<1x32xf32>
    %31 = vector.extract_strided_slice %24 {offsets = [0, 32], sizes = [1, 32], strides = [1, 1]} : vector<1x128xf32> to vector<1x32xf32>
    %32 = arith.negf %31 : vector<1x32xf32>
    %33 = math.exp %32 : vector<1x32xf32>
    %cst_15 = arith.constant 1.000000e+00 : f32
    %34 = vector.broadcast %cst_15 : f32 to vector<1x32xf32>
    %35 = arith.addf %34, %33 : vector<1x32xf32>
    %36 = arith.divf %34, %35 : vector<1x32xf32>
    %37 = vector.extract_strided_slice %24 {offsets = [0, 64], sizes = [1, 32], strides = [1, 1]} : vector<1x128xf32> to vector<1x32xf32>
    %38 = math.tanh %37 : vector<1x32xf32>
    %39 = vector.extract_strided_slice %24 {offsets = [0, 96], sizes = [1, 32], strides = [1, 1]} : vector<1x128xf32> to vector<1x32xf32>
    %40 = arith.negf %39 : vector<1x32xf32>
    %41 = math.exp %40 : vector<1x32xf32>
    %cst_16 = arith.constant 1.000000e+00 : f32
    %42 = vector.broadcast %cst_16 : f32 to vector<1x32xf32>
    %43 = arith.addf %42, %41 : vector<1x32xf32>
    %44 = arith.divf %42, %43 : vector<1x32xf32>
    %45 = arith.mulf %36, %19 : vector<1x32xf32>
    %46 = arith.mulf %30, %38 : vector<1x32xf32>
    %47 = arith.addf %45, %46 : vector<1x32xf32>
    %48 = math.tanh %47 : vector<1x32xf32>
    %49 = arith.mulf %44, %48 : vector<1x32xf32>
    %50 = arith.truncf %49 : vector<1x32xf32> to vector<1x32xbf16>
    %c0_17 = arith.constant 0 : index
    %c0_18 = arith.constant 0 : index
    %c0_19 = arith.constant 0 : index
    %51 = vector.load %arg9[%c0_17, %c0_18, %c0_19] : memref<1x8x32xbf16, #tpu.memory_space<vmem>>, vector<1x1x32xbf16>
    %52 = vector.shape_cast %51 : vector<1x1x32xbf16> to vector<1x32xbf16>
    %53 = vector.shape_cast %50 : vector<1x32xbf16> to vector<1x1x32xbf16>
    tpu.vector_store %arg9[%c0_17, %c0_18, %c0_19], %53 {strides = array<i32>} : memref<1x8x32xbf16, #tpu.memory_space<vmem>>, vector<1x1x32xbf16>,
    %54 = vector.extract_strided_slice %17 {offsets = [0, 1, 0], sizes = [1, 1, 128], strides = [1, 1, 1]} : vector<1x8x128xf32> to vector<1x1x128xf32>
    %55 = vector.shape_cast %54 : vector<1x1x128xf32> to vector<1x128xf32>
    %56 = arith.truncf %49 : vector<1x32xf32> to vector<1x32xbf16>
    %cst_20 = arith.constant dense<0.000000e+00> : vector<1x128xf32>
    %57 = tpu.matmul %56, %12, %cst_20 {dimension_numbers = #tpu.dot_dimension_numbers<[1], [0], [0], [1], [0, 0, 1, 1], [], []>} : vector<1x32xbf16>, vector<32x128xbf16>, vector<1x128xf32> -> vector<1x128xf32>
    %58 = arith.addf %55, %57 : vector<1x128xf32>
    %59 = vector.extract_strided_slice %58 {offsets = [0, 0], sizes = [1, 32], strides = [1, 1]} : vector<1x128xf32> to vector<1x32xf32>
    %60 = arith.negf %59 : vector<1x32xf32>
    %61 = math.exp %60 : vector<1x32xf32>
    %cst_21 = arith.constant 1.000000e+00 : f32
    %62 = vector.broadcast %cst_21 : f32 to vector<1x32xf32>
    %63 = arith.addf %62, %61 : vector<1x32xf32>
    %64 = arith.divf %62, %63 : vector<1x32xf32>
    %65 = vector.extract_strided_slice %58 {offsets = [0, 32], sizes = [1, 32], strides = [1, 1]} : vector<1x128xf32> to vector<1x32xf32>
    %66 = arith.negf %65 : vector<1x32xf32>
    %67 = math.exp %66 : vector<1x32xf32>
    %cst_22 = arith.constant 1.000000e+00 : f32
    %68 = vector.broadcast %cst_22 : f32 to vector<1x32xf32>
    %69 = arith.addf %68, %67 : vector<1x32xf32>
    %70 = arith.divf %68, %69 : vector<1x32xf32>
    %71 = vector.extract_strided_slice %58 {offsets = [0, 64], sizes = [1, 32], strides = [1, 1]} : vector<1x128xf32> to vector<1x32xf32>
    %72 = math.tanh %71 : vector<1x32xf32>
    %73 = vector.extract_strided_slice %58 {offsets = [0, 96], sizes = [1, 32], strides = [1, 1]} : vector<1x128xf32> to vector<1x32xf32>
    %74 = arith.negf %73 : vector<1x32xf32>
    %75 = math.exp %74 : vector<1x32xf32>
    %cst_23 = arith.constant 1.000000e+00 : f32
    %76 = vector.broadcast %cst_23 : f32 to vector<1x32xf32>
    %77 = arith.addf %76, %75 : vector<1x32xf32>
    %78 = arith.divf %76, %77 : vector<1x32xf32>
    %79 = arith.mulf %70, %47 : vector<1x32xf32>
    %80 = arith.mulf %64, %72 : vector<1x32xf32>
    %81 = arith.addf %79, %80 : vector<1x32xf32>
    %82 = math.tanh %81 : vector<1x32xf32>
    %83 = arith.mulf %78, %82 : vector<1x32xf32>
    %84 = arith.truncf %83 : vector<1x32xf32> to vector<1x32xbf16>
    %c0_24 = arith.constant 0 : index
    %c1 = arith.constant 1 : index
    %c0_25 = arith.constant 0 : index
    %85 = vector.load %arg9[%c0_24, %c1, %c0_25] : memref<1x8x32xbf16, #tpu.memory_space<vmem>>, vector<1x1x32xbf16>
    %86 = vector.shape_cast %85 : vector<1x1x32xbf16> to vector<1x32xbf16>
    %87 = vector.shape_cast %84 : vector<1x32xbf16> to vector<1x1x32xbf16>
    tpu.vector_store %arg9[%c0_24, %c1, %c0_25], %87 {strides = array<i32>} : memref<1x8x32xbf16, #tpu.memory_space<vmem>>, vector<1x1x32xbf16>,
    %88 = vector.extract_strided_slice %17 {offsets = [0, 2, 0], sizes = [1, 1, 128], strides = [1, 1, 1]} : vector<1x8x128xf32> to vector<1x1x128xf32>
    %89 = vector.shape_cast %88 : vector<1x1x128xf32> to vector<1x128xf32>
    %90 = arith.truncf %83 : vector<1x32xf32> to vector<1x32xbf16>
    %cst_26 = arith.constant dense<0.000000e+00> : vector<1x128xf32>
    %91 = tpu.matmul %90, %12, %cst_26 {dimension_numbers = #tpu.dot_dimension_numbers<[1], [0], [0], [1], [0, 0, 1, 1], [], []>} : vector<1x32xbf16>, vector<32x128xbf16>, vector<1x128xf32> -> vector<1x128xf32>
    %92 = arith.addf %89, %91 : vector<1x128xf32>
    %93 = vector.extract_strided_slice %92 {offsets = [0, 0], sizes = [1, 32], strides = [1, 1]} : vector<1x128xf32> to vector<1x32xf32>
    %94 = arith.negf %93 : vector<1x32xf32>
    %95 = math.exp %94 : vector<1x32xf32>
    %cst_27 = arith.constant 1.000000e+00 : f32
    %96 = vector.broadcast %cst_27 : f32 to vector<1x32xf32>
    %97 = arith.addf %96, %95 : vector<1x32xf32>
    %98 = arith.divf %96, %97 : vector<1x32xf32>
    %99 = vector.extract_strided_slice %92 {offsets = [0, 32], sizes = [1, 32], strides = [1, 1]} : vector<1x128xf32> to vector<1x32xf32>
    %100 = arith.negf %99 : vector<1x32xf32>
    %101 = math.exp %100 : vector<1x32xf32>
    %cst_28 = arith.constant 1.000000e+00 : f32
    %102 = vector.broadcast %cst_28 : f32 to vector<1x32xf32>
    %103 = arith.addf %102, %101 : vector<1x32xf32>
    %104 = arith.divf %102, %103 : vector<1x32xf32>
    %105 = vector.extract_strided_slice %92 {offsets = [0, 64], sizes = [1, 32], strides = [1, 1]} : vector<1x128xf32> to vector<1x32xf32>
    %106 = math.tanh %105 : vector<1x32xf32>
    %107 = vector.extract_strided_slice %92 {offsets = [0, 96], sizes = [1, 32], strides = [1, 1]} : vector<1x128xf32> to vector<1x32xf32>
    %108 = arith.negf %107 : vector<1x32xf32>
    %109 = math.exp %108 : vector<1x32xf32>
    %cst_29 = arith.constant 1.000000e+00 : f32
    %110 = vector.broadcast %cst_29 : f32 to vector<1x32xf32>
    %111 = arith.addf %110, %109 : vector<1x32xf32>
    %112 = arith.divf %110, %111 : vector<1x32xf32>
    %113 = arith.mulf %104, %81 : vector<1x32xf32>
    %114 = arith.mulf %98, %106 : vector<1x32xf32>
    %115 = arith.addf %113, %114 : vector<1x32xf32>
    %116 = math.tanh %115 : vector<1x32xf32>
    %117 = arith.mulf %112, %116 : vector<1x32xf32>
    %118 = arith.truncf %117 : vector<1x32xf32> to vector<1x32xbf16>
    %c0_30 = arith.constant 0 : index
    %c2 = arith.constant 2 : index
    %c0_31 = arith.constant 0 : index
    %119 = vector.load %arg9[%c0_30, %c2, %c0_31] : memref<1x8x32xbf16, #tpu.memory_space<vmem>>, vector<1x1x32xbf16>
    %120 = vector.shape_cast %119 : vector<1x1x32xbf16> to vector<1x32xbf16>
    %121 = vector.shape_cast %118 : vector<1x32xbf16> to vector<1x1x32xbf16>
    tpu.vector_store %arg9[%c0_30, %c2, %c0_31], %121 {strides = array<i32>} : memref<1x8x32xbf16, #tpu.memory_space<vmem>>, vector<1x1x32xbf16>,
    %122 = vector.extract_strided_slice %17 {offsets = [0, 3, 0], sizes = [1, 1, 128], strides = [1, 1, 1]} : vector<1x8x128xf32> to vector<1x1x128xf32>
    %123 = vector.shape_cast %122 : vector<1x1x128xf32> to vector<1x128xf32>
    %124 = arith.truncf %117 : vector<1x32xf32> to vector<1x32xbf16>
    %cst_32 = arith.constant dense<0.000000e+00> : vector<1x128xf32>
    %125 = tpu.matmul %124, %12, %cst_32 {dimension_numbers = #tpu.dot_dimension_numbers<[1], [0], [0], [1], [0, 0, 1, 1], [], []>} : vector<1x32xbf16>, vector<32x128xbf16>, vector<1x128xf32> -> vector<1x128xf32>
    %126 = arith.addf %123, %125 : vector<1x128xf32>
    %127 = vector.extract_strided_slice %126 {offsets = [0, 0], sizes = [1, 32], strides = [1, 1]} : vector<1x128xf32> to vector<1x32xf32>
    %128 = arith.negf %127 : vector<1x32xf32>
    %129 = math.exp %128 : vector<1x32xf32>
    %cst_33 = arith.constant 1.000000e+00 : f32
    %130 = vector.broadcast %cst_33 : f32 to vector<1x32xf32>
    %131 = arith.addf %130, %129 : vector<1x32xf32>
    %132 = arith.divf %130, %131 : vector<1x32xf32>
    %133 = vector.extract_strided_slice %126 {offsets = [0, 32], sizes = [1, 32], strides = [1, 1]} : vector<1x128xf32> to vector<1x32xf32>
    %134 = arith.negf %133 : vector<1x32xf32>
    %135 = math.exp %134 : vector<1x32xf32>
    %cst_34 = arith.constant 1.000000e+00 : f32
    %136 = vector.broadcast %cst_34 : f32 to vector<1x32xf32>
    %137 = arith.addf %136, %135 : vector<1x32xf32>
    %138 = arith.divf %136, %137 : vector<1x32xf32>
    %139 = vector.extract_strided_slice %126 {offsets = [0, 64], sizes = [1, 32], strides = [1, 1]} : vector<1x128xf32> to vector<1x32xf32>
    %140 = math.tanh %139 : vector<1x32xf32>
    %141 = vector.extract_strided_slice %126 {offsets = [0, 96], sizes = [1, 32], strides = [1, 1]} : vector<1x128xf32> to vector<1x32xf32>
    %142 = arith.negf %141 : vector<1x32xf32>
    %143 = math.exp %142 : vector<1x32xf32>
    %cst_35 = arith.constant 1.000000e+00 : f32
    %144 = vector.broadcast %cst_35 : f32 to vector<1x32xf32>
    %145 = arith.addf %144, %143 : vector<1x32xf32>
    %146 = arith.divf %144, %145 : vector<1x32xf32>
    %147 = arith.mulf %138, %115 : vector<1x32xf32>
    %148 = arith.mulf %132, %140 : vector<1x32xf32>
    %149 = arith.addf %147, %148 : vector<1x32xf32>
    %150 = math.tanh %149 : vector<1x32xf32>
    %151 = arith.mulf %146, %150 : vector<1x32xf32>
    %152 = arith.truncf %151 : vector<1x32xf32> to vector<1x32xbf16>
    %c0_36 = arith.constant 0 : index
    %c3 = arith.constant 3 : index
    %c0_37 = arith.constant 0 : index
    %153 = vector.load %arg9[%c0_36, %c3, %c0_37] : memref<1x8x32xbf16, #tpu.memory_space<vmem>>, vector<1x1x32xbf16>
    %154 = vector.shape_cast %153 : vector<1x1x32xbf16> to vector<1x32xbf16>
    %155 = vector.shape_cast %152 : vector<1x32xbf16> to vector<1x1x32xbf16>
    tpu.vector_store %arg9[%c0_36, %c3, %c0_37], %155 {strides = array<i32>} : memref<1x8x32xbf16, #tpu.memory_space<vmem>>, vector<1x1x32xbf16>,
    %156 = vector.extract_strided_slice %17 {offsets = [0, 4, 0], sizes = [1, 1, 128], strides = [1, 1, 1]} : vector<1x8x128xf32> to vector<1x1x128xf32>
    %157 = vector.shape_cast %156 : vector<1x1x128xf32> to vector<1x128xf32>
    %158 = arith.truncf %151 : vector<1x32xf32> to vector<1x32xbf16>
    %cst_38 = arith.constant dense<0.000000e+00> : vector<1x128xf32>
    %159 = tpu.matmul %158, %12, %cst_38 {dimension_numbers = #tpu.dot_dimension_numbers<[1], [0], [0], [1], [0, 0, 1, 1], [], []>} : vector<1x32xbf16>, vector<32x128xbf16>, vector<1x128xf32> -> vector<1x128xf32>
    %160 = arith.addf %157, %159 : vector<1x128xf32>
    %161 = vector.extract_strided_slice %160 {offsets = [0, 0], sizes = [1, 32], strides = [1, 1]} : vector<1x128xf32> to vector<1x32xf32>
    %162 = arith.negf %161 : vector<1x32xf32>
    %163 = math.exp %162 : vector<1x32xf32>
    %cst_39 = arith.constant 1.000000e+00 : f32
    %164 = vector.broadcast %cst_39 : f32 to vector<1x32xf32>
    %165 = arith.addf %164, %163 : vector<1x32xf32>
    %166 = arith.divf %164, %165 : vector<1x32xf32>
    %167 = vector.extract_strided_slice %160 {offsets = [0, 32], sizes = [1, 32], strides = [1, 1]} : vector<1x128xf32> to vector<1x32xf32>
    %168 = arith.negf %167 : vector<1x32xf32>
    %169 = math.exp %168 : vector<1x32xf32>
    %cst_40 = arith.constant 1.000000e+00 : f32
    %170 = vector.broadcast %cst_40 : f32 to vector<1x32xf32>
    %171 = arith.addf %170, %169 : vector<1x32xf32>
    %172 = arith.divf %170, %171 : vector<1x32xf32>
    %173 = vector.extract_strided_slice %160 {offsets = [0, 64], sizes = [1, 32], strides = [1, 1]} : vector<1x128xf32> to vector<1x32xf32>
    %174 = math.tanh %173 : vector<1x32xf32>
    %175 = vector.extract_strided_slice %160 {offsets = [0, 96], sizes = [1, 32], strides = [1, 1]} : vector<1x128xf32> to vector<1x32xf32>
    %176 = arith.negf %175 : vector<1x32xf32>
    %177 = math.exp %176 : vector<1x32xf32>
    %cst_41 = arith.constant 1.000000e+00 : f32
    %178 = vector.broadcast %cst_41 : f32 to vector<1x32xf32>
    %179 = arith.addf %178, %177 : vector<1x32xf32>
    %180 = arith.divf %178, %179 : vector<1x32xf32>
    %181 = arith.mulf %172, %149 : vector<1x32xf32>
    %182 = arith.mulf %166, %174 : vector<1x32xf32>
    %183 = arith.addf %181, %182 : vector<1x32xf32>
    %184 = math.tanh %183 : vector<1x32xf32>
    %185 = arith.mulf %180, %184 : vector<1x32xf32>
    %186 = arith.truncf %185 : vector<1x32xf32> to vector<1x32xbf16>
    %c0_42 = arith.constant 0 : index
    %c4 = arith.constant 4 : index
    %c0_43 = arith.constant 0 : index
    %187 = vector.load %arg9[%c0_42, %c4, %c0_43] : memref<1x8x32xbf16, #tpu.memory_space<vmem>>, vector<1x1x32xbf16>
    %188 = vector.shape_cast %187 : vector<1x1x32xbf16> to vector<1x32xbf16>
    %189 = vector.shape_cast %186 : vector<1x32xbf16> to vector<1x1x32xbf16>
    tpu.vector_store %arg9[%c0_42, %c4, %c0_43], %189 {strides = array<i32>} : memref<1x8x32xbf16, #tpu.memory_space<vmem>>, vector<1x1x32xbf16>,
    %190 = vector.extract_strided_slice %17 {offsets = [0, 5, 0], sizes = [1, 1, 128], strides = [1, 1, 1]} : vector<1x8x128xf32> to vector<1x1x128xf32>
    %191 = vector.shape_cast %190 : vector<1x1x128xf32> to vector<1x128xf32>
    %192 = arith.truncf %185 : vector<1x32xf32> to vector<1x32xbf16>
    %cst_44 = arith.constant dense<0.000000e+00> : vector<1x128xf32>
    %193 = tpu.matmul %192, %12, %cst_44 {dimension_numbers = #tpu.dot_dimension_numbers<[1], [0], [0], [1], [0, 0, 1, 1], [], []>} : vector<1x32xbf16>, vector<32x128xbf16>, vector<1x128xf32> -> vector<1x128xf32>
    %194 = arith.addf %191, %193 : vector<1x128xf32>
    %195 = vector.extract_strided_slice %194 {offsets = [0, 0], sizes = [1, 32], strides = [1, 1]} : vector<1x128xf32> to vector<1x32xf32>
    %196 = arith.negf %195 : vector<1x32xf32>
    %197 = math.exp %196 : vector<1x32xf32>
    %cst_45 = arith.constant 1.000000e+00 : f32
    %198 = vector.broadcast %cst_45 : f32 to vector<1x32xf32>
    %199 = arith.addf %198, %197 : vector<1x32xf32>
    %200 = arith.divf %198, %199 : vector<1x32xf32>
    %201 = vector.extract_strided_slice %194 {offsets = [0, 32], sizes = [1, 32], strides = [1, 1]} : vector<1x128xf32> to vector<1x32xf32>
    %202 = arith.negf %201 : vector<1x32xf32>
    %203 = math.exp %202 : vector<1x32xf32>
    %cst_46 = arith.constant 1.000000e+00 : f32
    %204 = vector.broadcast %cst_46 : f32 to vector<1x32xf32>
    %205 = arith.addf %204, %203 : vector<1x32xf32>
    %206 = arith.divf %204, %205 : vector<1x32xf32>
    %207 = vector.extract_strided_slice %194 {offsets = [0, 64], sizes = [1, 32], strides = [1, 1]} : vector<1x128xf32> to vector<1x32xf32>
    %208 = math.tanh %207 : vector<1x32xf32>
    %209 = vector.extract_strided_slice %194 {offsets = [0, 96], sizes = [1, 32], strides = [1, 1]} : vector<1x128xf32> to vector<1x32xf32>
    %210 = arith.negf %209 : vector<1x32xf32>
    %211 = math.exp %210 : vector<1x32xf32>
    %cst_47 = arith.constant 1.000000e+00 : f32
    %212 = vector.broadcast %cst_47 : f32 to vector<1x32xf32>
    %213 = arith.addf %212, %211 : vector<1x32xf32>
    %214 = arith.divf %212, %213 : vector<1x32xf32>
    %215 = arith.mulf %206, %183 : vector<1x32xf32>
    %216 = arith.mulf %200, %208 : vector<1x32xf32>
    %217 = arith.addf %215, %216 : vector<1x32xf32>
    %218 = math.tanh %217 : vector<1x32xf32>
    %219 = arith.mulf %214, %218 : vector<1x32xf32>
    %220 = arith.truncf %219 : vector<1x32xf32> to vector<1x32xbf16>
    %c0_48 = arith.constant 0 : index
    %c5 = arith.constant 5 : index
    %c0_49 = arith.constant 0 : index
    %221 = vector.load %arg9[%c0_48, %c5, %c0_49] : memref<1x8x32xbf16, #tpu.memory_space<vmem>>, vector<1x1x32xbf16>
    %222 = vector.shape_cast %221 : vector<1x1x32xbf16> to vector<1x32xbf16>
    %223 = vector.shape_cast %220 : vector<1x32xbf16> to vector<1x1x32xbf16>
    tpu.vector_store %arg9[%c0_48, %c5, %c0_49], %223 {strides = array<i32>} : memref<1x8x32xbf16, #tpu.memory_space<vmem>>, vector<1x1x32xbf16>,
    %224 = vector.extract_strided_slice %17 {offsets = [0, 6, 0], sizes = [1, 1, 128], strides = [1, 1, 1]} : vector<1x8x128xf32> to vector<1x1x128xf32>
    %225 = vector.shape_cast %224 : vector<1x1x128xf32> to vector<1x128xf32>
    %226 = arith.truncf %219 : vector<1x32xf32> to vector<1x32xbf16>
    %cst_50 = arith.constant dense<0.000000e+00> : vector<1x128xf32>
    %227 = tpu.matmul %226, %12, %cst_50 {dimension_numbers = #tpu.dot_dimension_numbers<[1], [0], [0], [1], [0, 0, 1, 1], [], []>} : vector<1x32xbf16>, vector<32x128xbf16>, vector<1x128xf32> -> vector<1x128xf32>
    %228 = arith.addf %225, %227 : vector<1x128xf32>
    %229 = vector.extract_strided_slice %228 {offsets = [0, 0], sizes = [1, 32], strides = [1, 1]} : vector<1x128xf32> to vector<1x32xf32>
    %230 = arith.negf %229 : vector<1x32xf32>
    %231 = math.exp %230 : vector<1x32xf32>
    %cst_51 = arith.constant 1.000000e+00 : f32
    %232 = vector.broadcast %cst_51 : f32 to vector<1x32xf32>
    %233 = arith.addf %232, %231 : vector<1x32xf32>
    %234 = arith.divf %232, %233 : vector<1x32xf32>
    %235 = vector.extract_strided_slice %228 {offsets = [0, 32], sizes = [1, 32], strides = [1, 1]} : vector<1x128xf32> to vector<1x32xf32>
    %236 = arith.negf %235 : vector<1x32xf32>
    %237 = math.exp %236 : vector<1x32xf32>
    %cst_52 = arith.constant 1.000000e+00 : f32
    %238 = vector.broadcast %cst_52 : f32 to vector<1x32xf32>
    %239 = arith.addf %238, %237 : vector<1x32xf32>
    %240 = arith.divf %238, %239 : vector<1x32xf32>
    %241 = vector.extract_strided_slice %228 {offsets = [0, 64], sizes = [1, 32], strides = [1, 1]} : vector<1x128xf32> to vector<1x32xf32>
    %242 = math.tanh %241 : vector<1x32xf32>
    %243 = vector.extract_strided_slice %228 {offsets = [0, 96], sizes = [1, 32], strides = [1, 1]} : vector<1x128xf32> to vector<1x32xf32>
    %244 = arith.negf %243 : vector<1x32xf32>
    %245 = math.exp %244 : vector<1x32xf32>
    %cst_53 = arith.constant 1.000000e+00 : f32
    %246 = vector.broadcast %cst_53 : f32 to vector<1x32xf32>
    %247 = arith.addf %246, %245 : vector<1x32xf32>
    %248 = arith.divf %246, %247 : vector<1x32xf32>
    %249 = arith.mulf %240, %217 : vector<1x32xf32>
    %250 = arith.mulf %234, %242 : vector<1x32xf32>
    %251 = arith.addf %249, %250 : vector<1x32xf32>
    %252 = math.tanh %251 : vector<1x32xf32>
    %253 = arith.mulf %248, %252 : vector<1x32xf32>
    %254 = arith.truncf %253 : vector<1x32xf32> to vector<1x32xbf16>
    %c0_54 = arith.constant 0 : index
    %c6 = arith.constant 6 : index
    %c0_55 = arith.constant 0 : index
    %255 = vector.load %arg9[%c0_54, %c6, %c0_55] : memref<1x8x32xbf16, #tpu.memory_space<vmem>>, vector<1x1x32xbf16>
    %256 = vector.shape_cast %255 : vector<1x1x32xbf16> to vector<1x32xbf16>
    %257 = vector.shape_cast %254 : vector<1x32xbf16> to vector<1x1x32xbf16>
    tpu.vector_store %arg9[%c0_54, %c6, %c0_55], %257 {strides = array<i32>} : memref<1x8x32xbf16, #tpu.memory_space<vmem>>, vector<1x1x32xbf16>,
    %258 = vector.extract_strided_slice %17 {offsets = [0, 7, 0], sizes = [1, 1, 128], strides = [1, 1, 1]} : vector<1x8x128xf32> to vector<1x1x128xf32>
    %259 = vector.shape_cast %258 : vector<1x1x128xf32> to vector<1x128xf32>
    %260 = arith.truncf %253 : vector<1x32xf32> to vector<1x32xbf16>
    %cst_56 = arith.constant dense<0.000000e+00> : vector<1x128xf32>
    %261 = tpu.matmul %260, %12, %cst_56 {dimension_numbers = #tpu.dot_dimension_numbers<[1], [0], [0], [1], [0, 0, 1, 1], [], []>} : vector<1x32xbf16>, vector<32x128xbf16>, vector<1x128xf32> -> vector<1x128xf32>
    %262 = arith.addf %259, %261 : vector<1x128xf32>
    %263 = vector.extract_strided_slice %262 {offsets = [0, 0], sizes = [1, 32], strides = [1, 1]} : vector<1x128xf32> to vector<1x32xf32>
    %264 = arith.negf %263 : vector<1x32xf32>
    %265 = math.exp %264 : vector<1x32xf32>
    %cst_57 = arith.constant 1.000000e+00 : f32
    %266 = vector.broadcast %cst_57 : f32 to vector<1x32xf32>
    %267 = arith.addf %266, %265 : vector<1x32xf32>
    %268 = arith.divf %266, %267 : vector<1x32xf32>
    %269 = vector.extract_strided_slice %262 {offsets = [0, 32], sizes = [1, 32], strides = [1, 1]} : vector<1x128xf32> to vector<1x32xf32>
    %270 = arith.negf %269 : vector<1x32xf32>
    %271 = math.exp %270 : vector<1x32xf32>
    %cst_58 = arith.constant 1.000000e+00 : f32
    %272 = vector.broadcast %cst_58 : f32 to vector<1x32xf32>
    %273 = arith.addf %272, %271 : vector<1x32xf32>
    %274 = arith.divf %272, %273 : vector<1x32xf32>
    %275 = vector.extract_strided_slice %262 {offsets = [0, 64], sizes = [1, 32], strides = [1, 1]} : vector<1x128xf32> to vector<1x32xf32>
    %276 = math.tanh %275 : vector<1x32xf32>
    %277 = vector.extract_strided_slice %262 {offsets = [0, 96], sizes = [1, 32], strides = [1, 1]} : vector<1x128xf32> to vector<1x32xf32>
    %278 = arith.negf %277 : vector<1x32xf32>
    %279 = math.exp %278 : vector<1x32xf32>
    %cst_59 = arith.constant 1.000000e+00 : f32
    %280 = vector.broadcast %cst_59 : f32 to vector<1x32xf32>
    %281 = arith.addf %280, %279 : vector<1x32xf32>
    %282 = arith.divf %280, %281 : vector<1x32xf32>
    %283 = arith.mulf %274, %251 : vector<1x32xf32>
    %284 = arith.mulf %268, %276 : vector<1x32xf32>
    %285 = arith.addf %283, %284 : vector<1x32xf32>
    %286 = math.tanh %285 : vector<1x32xf32>
    %287 = arith.mulf %282, %286 : vector<1x32xf32>
    %288 = arith.truncf %287 : vector<1x32xf32> to vector<1x32xbf16>
    %c0_60 = arith.constant 0 : index
    %c7 = arith.constant 7 : index
    %c0_61 = arith.constant 0 : index
    %289 = vector.load %arg9[%c0_60, %c7, %c0_61] : memref<1x8x32xbf16, #tpu.memory_space<vmem>>, vector<1x1x32xbf16>
    %290 = vector.shape_cast %289 : vector<1x1x32xbf16> to vector<1x32xbf16>
    %291 = vector.shape_cast %288 : vector<1x32xbf16> to vector<1x1x32xbf16>
    tpu.vector_store %arg9[%c0_60, %c7, %c0_61], %291 {strides = array<i32>} : memref<1x8x32xbf16, #tpu.memory_space<vmem>>, vector<1x1x32xbf16>,
    %c0_62 = arith.constant 0 : index
    %c0_63 = arith.constant 0 : index
    %c0_64 = arith.constant 0 : index
    %292 = vector.load %arg9[%c0_62, %c0_63, %c0_64] : memref<1x8x32xbf16, #tpu.memory_space<vmem>>, vector<1x8x32xbf16>
    %293 = vector.shape_cast %292 : vector<1x8x32xbf16> to vector<8x32xbf16>
    %c0_65 = arith.constant 0 : index
    %c0_66 = arith.constant 0 : index
    %294 = vector.load %arg6[%c0_65, %c0_66] : memref<32x128xbf16, #tpu.memory_space<vmem>>, vector<32x128xbf16>
    %c0_67 = arith.constant 0 : index
    %c0_68 = arith.constant 0 : index
    %295 = vector.load %arg7[%c0_67, %c0_68] : memref<32x128xbf16, #tpu.memory_space<vmem>>, vector<32x128xbf16>
    %c0_69 = arith.constant 0 : index
    %c0_70 = arith.constant 0 : index
    %296 = vector.load %arg8[%c0_69, %c0_70] : memref<1x128xf32, #tpu.memory_space<vmem>>, vector<1x128xf32>
    %cst_71 = arith.constant dense<0.000000e+00> : vector<8x128xf32>
    %297 = tpu.matmul %293, %294, %cst_71 {dimension_numbers = #tpu.dot_dimension_numbers<[1], [0], [0], [1], [0, 0, 1, 1], [], []>} : vector<8x32xbf16>, vector<32x128xbf16>, vector<8x128xf32> -> vector<8x128xf32>
    %298 = vector.broadcast %296 : vector<1x128xf32> to vector<8x128xf32>
    %299 = arith.addf %297, %298 : vector<8x128xf32>
    %300 = vector.shape_cast %299 : vector<8x128xf32> to vector<1x8x128xf32>
    %cst_72 = arith.constant 0.000000e+00 : f32
    %301 = vector.broadcast %cst_72 : f32 to vector<1x32xf32>
    %cst_73 = arith.constant 0.000000e+00 : f32
    %302 = vector.broadcast %cst_73 : f32 to vector<1x32xf32>
    %303 = vector.extract_strided_slice %300 {offsets = [0, 0, 0], sizes = [1, 1, 128], strides = [1, 1, 1]} : vector<1x8x128xf32> to vector<1x1x128xf32>
    %304 = vector.shape_cast %303 : vector<1x1x128xf32> to vector<1x128xf32>
    %305 = arith.truncf %301 : vector<1x32xf32> to vector<1x32xbf16>
    %cst_74 = arith.constant dense<0.000000e+00> : vector<1x128xf32>
    %306 = tpu.matmul %305, %295, %cst_74 {dimension_numbers = #tpu.dot_dimension_numbers<[1], [0], [0], [1], [0, 0, 1, 1], [], []>} : vector<1x32xbf16>, vector<32x128xbf16>, vector<1x128xf32> -> vector<1x128xf32>
    %307 = arith.addf %304, %306 : vector<1x128xf32>
    %308 = vector.extract_strided_slice %307 {offsets = [0, 0], sizes = [1, 32], strides = [1, 1]} : vector<1x128xf32> to vector<1x32xf32>
    %309 = arith.negf %308 : vector<1x32xf32>
    %310 = math.exp %309 : vector<1x32xf32>
    %cst_75 = arith.constant 1.000000e+00 : f32
    %311 = vector.broadcast %cst_75 : f32 to vector<1x32xf32>
    %312 = arith.addf %311, %310 : vector<1x32xf32>
    %313 = arith.divf %311, %312 : vector<1x32xf32>
    %314 = vector.extract_strided_slice %307 {offsets = [0, 32], sizes = [1, 32], strides = [1, 1]} : vector<1x128xf32> to vector<1x32xf32>
    %315 = arith.negf %314 : vector<1x32xf32>
    %316 = math.exp %315 : vector<1x32xf32>
    %cst_76 = arith.constant 1.000000e+00 : f32
    %317 = vector.broadcast %cst_76 : f32 to vector<1x32xf32>
    %318 = arith.addf %317, %316 : vector<1x32xf32>
    %319 = arith.divf %317, %318 : vector<1x32xf32>
    %320 = vector.extract_strided_slice %307 {offsets = [0, 64], sizes = [1, 32], strides = [1, 1]} : vector<1x128xf32> to vector<1x32xf32>
    %321 = math.tanh %320 : vector<1x32xf32>
    %322 = vector.extract_strided_slice %307 {offsets = [0, 96], sizes = [1, 32], strides = [1, 1]} : vector<1x128xf32> to vector<1x32xf32>
    %323 = arith.negf %322 : vector<1x32xf32>
    %324 = math.exp %323 : vector<1x32xf32>
    %cst_77 = arith.constant 1.000000e+00 : f32
    %325 = vector.broadcast %cst_77 : f32 to vector<1x32xf32>
    %326 = arith.addf %325, %324 : vector<1x32xf32>
    %327 = arith.divf %325, %326 : vector<1x32xf32>
    %328 = arith.mulf %319, %302 : vector<1x32xf32>
    %329 = arith.mulf %313, %321 : vector<1x32xf32>
    %330 = arith.addf %328, %329 : vector<1x32xf32>
    %331 = math.tanh %330 : vector<1x32xf32>
    %332 = arith.mulf %327, %331 : vector<1x32xf32>
    %333 = arith.truncf %332 : vector<1x32xf32> to vector<1x32xbf16>
    %c0_78 = arith.constant 0 : index
    %c0_79 = arith.constant 0 : index
    %c0_80 = arith.constant 0 : index
    %334 = vector.load %arg10[%c0_78, %c0_79, %c0_80] : memref<1x8x32xbf16, #tpu.memory_space<vmem>>, vector<1x1x32xbf16>
    %335 = vector.shape_cast %334 : vector<1x1x32xbf16> to vector<1x32xbf16>
    %336 = vector.shape_cast %333 : vector<1x32xbf16> to vector<1x1x32xbf16>
    tpu.vector_store %arg10[%c0_78, %c0_79, %c0_80], %336 {strides = array<i32>} : memref<1x8x32xbf16, #tpu.memory_space<vmem>>, vector<1x1x32xbf16>,
    %337 = vector.extract_strided_slice %300 {offsets = [0, 1, 0], sizes = [1, 1, 128], strides = [1, 1, 1]} : vector<1x8x128xf32> to vector<1x1x128xf32>
    %338 = vector.shape_cast %337 : vector<1x1x128xf32> to vector<1x128xf32>
    %339 = arith.truncf %332 : vector<1x32xf32> to vector<1x32xbf16>
    %cst_81 = arith.constant dense<0.000000e+00> : vector<1x128xf32>
    %340 = tpu.matmul %339, %295, %cst_81 {dimension_numbers = #tpu.dot_dimension_numbers<[1], [0], [0], [1], [0, 0, 1, 1], [], []>} : vector<1x32xbf16>, vector<32x128xbf16>, vector<1x128xf32> -> vector<1x128xf32>
    %341 = arith.addf %338, %340 : vector<1x128xf32>
    %342 = vector.extract_strided_slice %341 {offsets = [0, 0], sizes = [1, 32], strides = [1, 1]} : vector<1x128xf32> to vector<1x32xf32>
    %343 = arith.negf %342 : vector<1x32xf32>
    %344 = math.exp %343 : vector<1x32xf32>
    %cst_82 = arith.constant 1.000000e+00 : f32
    %345 = vector.broadcast %cst_82 : f32 to vector<1x32xf32>
    %346 = arith.addf %345, %344 : vector<1x32xf32>
    %347 = arith.divf %345, %346 : vector<1x32xf32>
    %348 = vector.extract_strided_slice %341 {offsets = [0, 32], sizes = [1, 32], strides = [1, 1]} : vector<1x128xf32> to vector<1x32xf32>
    %349 = arith.negf %348 : vector<1x32xf32>
    %350 = math.exp %349 : vector<1x32xf32>
    %cst_83 = arith.constant 1.000000e+00 : f32
    %351 = vector.broadcast %cst_83 : f32 to vector<1x32xf32>
    %352 = arith.addf %351, %350 : vector<1x32xf32>
    %353 = arith.divf %351, %352 : vector<1x32xf32>
    %354 = vector.extract_strided_slice %341 {offsets = [0, 64], sizes = [1, 32], strides = [1, 1]} : vector<1x128xf32> to vector<1x32xf32>
    %355 = math.tanh %354 : vector<1x32xf32>
    %356 = vector.extract_strided_slice %341 {offsets = [0, 96], sizes = [1, 32], strides = [1, 1]} : vector<1x128xf32> to vector<1x32xf32>
    %357 = arith.negf %356 : vector<1x32xf32>
    %358 = math.exp %357 : vector<1x32xf32>
    %cst_84 = arith.constant 1.000000e+00 : f32
    %359 = vector.broadcast %cst_84 : f32 to vector<1x32xf32>
    %360 = arith.addf %359, %358 : vector<1x32xf32>
    %361 = arith.divf %359, %360 : vector<1x32xf32>
    %362 = arith.mulf %353, %330 : vector<1x32xf32>
    %363 = arith.mulf %347, %355 : vector<1x32xf32>
    %364 = arith.addf %362, %363 : vector<1x32xf32>
    %365 = math.tanh %364 : vector<1x32xf32>
    %366 = arith.mulf %361, %365 : vector<1x32xf32>
    %367 = arith.truncf %366 : vector<1x32xf32> to vector<1x32xbf16>
    %c0_85 = arith.constant 0 : index
    %c1_86 = arith.constant 1 : index
    %c0_87 = arith.constant 0 : index
    %368 = vector.load %arg10[%c0_85, %c1_86, %c0_87] : memref<1x8x32xbf16, #tpu.memory_space<vmem>>, vector<1x1x32xbf16>
    %369 = vector.shape_cast %368 : vector<1x1x32xbf16> to vector<1x32xbf16>
    %370 = vector.shape_cast %367 : vector<1x32xbf16> to vector<1x1x32xbf16>
    tpu.vector_store %arg10[%c0_85, %c1_86, %c0_87], %370 {strides = array<i32>} : memref<1x8x32xbf16, #tpu.memory_space<vmem>>, vector<1x1x32xbf16>,
    %371 = vector.extract_strided_slice %300 {offsets = [0, 2, 0], sizes = [1, 1, 128], strides = [1, 1, 1]} : vector<1x8x128xf32> to vector<1x1x128xf32>
    %372 = vector.shape_cast %371 : vector<1x1x128xf32> to vector<1x128xf32>
    %373 = arith.truncf %366 : vector<1x32xf32> to vector<1x32xbf16>
    %cst_88 = arith.constant dense<0.000000e+00> : vector<1x128xf32>
    %374 = tpu.matmul %373, %295, %cst_88 {dimension_numbers = #tpu.dot_dimension_numbers<[1], [0], [0], [1], [0, 0, 1, 1], [], []>} : vector<1x32xbf16>, vector<32x128xbf16>, vector<1x128xf32> -> vector<1x128xf32>
    %375 = arith.addf %372, %374 : vector<1x128xf32>
    %376 = vector.extract_strided_slice %375 {offsets = [0, 0], sizes = [1, 32], strides = [1, 1]} : vector<1x128xf32> to vector<1x32xf32>
    %377 = arith.negf %376 : vector<1x32xf32>
    %378 = math.exp %377 : vector<1x32xf32>
    %cst_89 = arith.constant 1.000000e+00 : f32
    %379 = vector.broadcast %cst_89 : f32 to vector<1x32xf32>
    %380 = arith.addf %379, %378 : vector<1x32xf32>
    %381 = arith.divf %379, %380 : vector<1x32xf32>
    %382 = vector.extract_strided_slice %375 {offsets = [0, 32], sizes = [1, 32], strides = [1, 1]} : vector<1x128xf32> to vector<1x32xf32>
    %383 = arith.negf %382 : vector<1x32xf32>
    %384 = math.exp %383 : vector<1x32xf32>
    %cst_90 = arith.constant 1.000000e+00 : f32
    %385 = vector.broadcast %cst_90 : f32 to vector<1x32xf32>
    %386 = arith.addf %385, %384 : vector<1x32xf32>
    %387 = arith.divf %385, %386 : vector<1x32xf32>
    %388 = vector.extract_strided_slice %375 {offsets = [0, 64], sizes = [1, 32], strides = [1, 1]} : vector<1x128xf32> to vector<1x32xf32>
    %389 = math.tanh %388 : vector<1x32xf32>
    %390 = vector.extract_strided_slice %375 {offsets = [0, 96], sizes = [1, 32], strides = [1, 1]} : vector<1x128xf32> to vector<1x32xf32>
    %391 = arith.negf %390 : vector<1x32xf32>
    %392 = math.exp %391 : vector<1x32xf32>
    %cst_91 = arith.constant 1.000000e+00 : f32
    %393 = vector.broadcast %cst_91 : f32 to vector<1x32xf32>
    %394 = arith.addf %393, %392 : vector<1x32xf32>
    %395 = arith.divf %393, %394 : vector<1x32xf32>
    %396 = arith.mulf %387, %364 : vector<1x32xf32>
    %397 = arith.mulf %381, %389 : vector<1x32xf32>
    %398 = arith.addf %396, %397 : vector<1x32xf32>
    %399 = math.tanh %398 : vector<1x32xf32>
    %400 = arith.mulf %395, %399 : vector<1x32xf32>
    %401 = arith.truncf %400 : vector<1x32xf32> to vector<1x32xbf16>
    %c0_92 = arith.constant 0 : index
    %c2_93 = arith.constant 2 : index
    %c0_94 = arith.constant 0 : index
    %402 = vector.load %arg10[%c0_92, %c2_93, %c0_94] : memref<1x8x32xbf16, #tpu.memory_space<vmem>>, vector<1x1x32xbf16>
    %403 = vector.shape_cast %402 : vector<1x1x32xbf16> to vector<1x32xbf16>
    %404 = vector.shape_cast %401 : vector<1x32xbf16> to vector<1x1x32xbf16>
    tpu.vector_store %arg10[%c0_92, %c2_93, %c0_94], %404 {strides = array<i32>} : memref<1x8x32xbf16, #tpu.memory_space<vmem>>, vector<1x1x32xbf16>,
    %405 = vector.extract_strided_slice %300 {offsets = [0, 3, 0], sizes = [1, 1, 128], strides = [1, 1, 1]} : vector<1x8x128xf32> to vector<1x1x128xf32>
    %406 = vector.shape_cast %405 : vector<1x1x128xf32> to vector<1x128xf32>
    %407 = arith.truncf %400 : vector<1x32xf32> to vector<1x32xbf16>
    %cst_95 = arith.constant dense<0.000000e+00> : vector<1x128xf32>
    %408 = tpu.matmul %407, %295, %cst_95 {dimension_numbers = #tpu.dot_dimension_numbers<[1], [0], [0], [1], [0, 0, 1, 1], [], []>} : vector<1x32xbf16>, vector<32x128xbf16>, vector<1x128xf32> -> vector<1x128xf32>
    %409 = arith.addf %406, %408 : vector<1x128xf32>
    %410 = vector.extract_strided_slice %409 {offsets = [0, 0], sizes = [1, 32], strides = [1, 1]} : vector<1x128xf32> to vector<1x32xf32>
    %411 = arith.negf %410 : vector<1x32xf32>
    %412 = math.exp %411 : vector<1x32xf32>
    %cst_96 = arith.constant 1.000000e+00 : f32
    %413 = vector.broadcast %cst_96 : f32 to vector<1x32xf32>
    %414 = arith.addf %413, %412 : vector<1x32xf32>
    %415 = arith.divf %413, %414 : vector<1x32xf32>
    %416 = vector.extract_strided_slice %409 {offsets = [0, 32], sizes = [1, 32], strides = [1, 1]} : vector<1x128xf32> to vector<1x32xf32>
    %417 = arith.negf %416 : vector<1x32xf32>
    %418 = math.exp %417 : vector<1x32xf32>
    %cst_97 = arith.constant 1.000000e+00 : f32
    %419 = vector.broadcast %cst_97 : f32 to vector<1x32xf32>
    %420 = arith.addf %419, %418 : vector<1x32xf32>
    %421 = arith.divf %419, %420 : vector<1x32xf32>
    %422 = vector.extract_strided_slice %409 {offsets = [0, 64], sizes = [1, 32], strides = [1, 1]} : vector<1x128xf32> to vector<1x32xf32>
    %423 = math.tanh %422 : vector<1x32xf32>
    %424 = vector.extract_strided_slice %409 {offsets = [0, 96], sizes = [1, 32], strides = [1, 1]} : vector<1x128xf32> to vector<1x32xf32>
    %425 = arith.negf %424 : vector<1x32xf32>
    %426 = math.exp %425 : vector<1x32xf32>
    %cst_98 = arith.constant 1.000000e+00 : f32
    %427 = vector.broadcast %cst_98 : f32 to vector<1x32xf32>
    %428 = arith.addf %427, %426 : vector<1x32xf32>
    %429 = arith.divf %427, %428 : vector<1x32xf32>
    %430 = arith.mulf %421, %398 : vector<1x32xf32>
    %431 = arith.mulf %415, %423 : vector<1x32xf32>
    %432 = arith.addf %430, %431 : vector<1x32xf32>
    %433 = math.tanh %432 : vector<1x32xf32>
    %434 = arith.mulf %429, %433 : vector<1x32xf32>
    %435 = arith.truncf %434 : vector<1x32xf32> to vector<1x32xbf16>
    %c0_99 = arith.constant 0 : index
    %c3_100 = arith.constant 3 : index
    %c0_101 = arith.constant 0 : index
    %436 = vector.load %arg10[%c0_99, %c3_100, %c0_101] : memref<1x8x32xbf16, #tpu.memory_space<vmem>>, vector<1x1x32xbf16>
    %437 = vector.shape_cast %436 : vector<1x1x32xbf16> to vector<1x32xbf16>
    %438 = vector.shape_cast %435 : vector<1x32xbf16> to vector<1x1x32xbf16>
    tpu.vector_store %arg10[%c0_99, %c3_100, %c0_101], %438 {strides = array<i32>} : memref<1x8x32xbf16, #tpu.memory_space<vmem>>, vector<1x1x32xbf16>,
    %439 = vector.extract_strided_slice %300 {offsets = [0, 4, 0], sizes = [1, 1, 128], strides = [1, 1, 1]} : vector<1x8x128xf32> to vector<1x1x128xf32>
    %440 = vector.shape_cast %439 : vector<1x1x128xf32> to vector<1x128xf32>
    %441 = arith.truncf %434 : vector<1x32xf32> to vector<1x32xbf16>
    %cst_102 = arith.constant dense<0.000000e+00> : vector<1x128xf32>
    %442 = tpu.matmul %441, %295, %cst_102 {dimension_numbers = #tpu.dot_dimension_numbers<[1], [0], [0], [1], [0, 0, 1, 1], [], []>} : vector<1x32xbf16>, vector<32x128xbf16>, vector<1x128xf32> -> vector<1x128xf32>
    %443 = arith.addf %440, %442 : vector<1x128xf32>
    %444 = vector.extract_strided_slice %443 {offsets = [0, 0], sizes = [1, 32], strides = [1, 1]} : vector<1x128xf32> to vector<1x32xf32>
    %445 = arith.negf %444 : vector<1x32xf32>
    %446 = math.exp %445 : vector<1x32xf32>
    %cst_103 = arith.constant 1.000000e+00 : f32
    %447 = vector.broadcast %cst_103 : f32 to vector<1x32xf32>
    %448 = arith.addf %447, %446 : vector<1x32xf32>
    %449 = arith.divf %447, %448 : vector<1x32xf32>
    %450 = vector.extract_strided_slice %443 {offsets = [0, 32], sizes = [1, 32], strides = [1, 1]} : vector<1x128xf32> to vector<1x32xf32>
    %451 = arith.negf %450 : vector<1x32xf32>
    %452 = math.exp %451 : vector<1x32xf32>
    %cst_104 = arith.constant 1.000000e+00 : f32
    %453 = vector.broadcast %cst_104 : f32 to vector<1x32xf32>
    %454 = arith.addf %453, %452 : vector<1x32xf32>
    %455 = arith.divf %453, %454 : vector<1x32xf32>
    %456 = vector.extract_strided_slice %443 {offsets = [0, 64], sizes = [1, 32], strides = [1, 1]} : vector<1x128xf32> to vector<1x32xf32>
    %457 = math.tanh %456 : vector<1x32xf32>
    %458 = vector.extract_strided_slice %443 {offsets = [0, 96], sizes = [1, 32], strides = [1, 1]} : vector<1x128xf32> to vector<1x32xf32>
    %459 = arith.negf %458 : vector<1x32xf32>
    %460 = math.exp %459 : vector<1x32xf32>
    %cst_105 = arith.constant 1.000000e+00 : f32
    %461 = vector.broadcast %cst_105 : f32 to vector<1x32xf32>
    %462 = arith.addf %461, %460 : vector<1x32xf32>
    %463 = arith.divf %461, %462 : vector<1x32xf32>
    %464 = arith.mulf %455, %432 : vector<1x32xf32>
    %465 = arith.mulf %449, %457 : vector<1x32xf32>
    %466 = arith.addf %464, %465 : vector<1x32xf32>
    %467 = math.tanh %466 : vector<1x32xf32>
    %468 = arith.mulf %463, %467 : vector<1x32xf32>
    %469 = arith.truncf %468 : vector<1x32xf32> to vector<1x32xbf16>
    %c0_106 = arith.constant 0 : index
    %c4_107 = arith.constant 4 : index
    %c0_108 = arith.constant 0 : index
    %470 = vector.load %arg10[%c0_106, %c4_107, %c0_108] : memref<1x8x32xbf16, #tpu.memory_space<vmem>>, vector<1x1x32xbf16>
    %471 = vector.shape_cast %470 : vector<1x1x32xbf16> to vector<1x32xbf16>
    %472 = vector.shape_cast %469 : vector<1x32xbf16> to vector<1x1x32xbf16>
    tpu.vector_store %arg10[%c0_106, %c4_107, %c0_108], %472 {strides = array<i32>} : memref<1x8x32xbf16, #tpu.memory_space<vmem>>, vector<1x1x32xbf16>,
    %473 = vector.extract_strided_slice %300 {offsets = [0, 5, 0], sizes = [1, 1, 128], strides = [1, 1, 1]} : vector<1x8x128xf32> to vector<1x1x128xf32>
    %474 = vector.shape_cast %473 : vector<1x1x128xf32> to vector<1x128xf32>
    %475 = arith.truncf %468 : vector<1x32xf32> to vector<1x32xbf16>
    %cst_109 = arith.constant dense<0.000000e+00> : vector<1x128xf32>
    %476 = tpu.matmul %475, %295, %cst_109 {dimension_numbers = #tpu.dot_dimension_numbers<[1], [0], [0], [1], [0, 0, 1, 1], [], []>} : vector<1x32xbf16>, vector<32x128xbf16>, vector<1x128xf32> -> vector<1x128xf32>
    %477 = arith.addf %474, %476 : vector<1x128xf32>
    %478 = vector.extract_strided_slice %477 {offsets = [0, 0], sizes = [1, 32], strides = [1, 1]} : vector<1x128xf32> to vector<1x32xf32>
    %479 = arith.negf %478 : vector<1x32xf32>
    %480 = math.exp %479 : vector<1x32xf32>
    %cst_110 = arith.constant 1.000000e+00 : f32
    %481 = vector.broadcast %cst_110 : f32 to vector<1x32xf32>
    %482 = arith.addf %481, %480 : vector<1x32xf32>
    %483 = arith.divf %481, %482 : vector<1x32xf32>
    %484 = vector.extract_strided_slice %477 {offsets = [0, 32], sizes = [1, 32], strides = [1, 1]} : vector<1x128xf32> to vector<1x32xf32>
    %485 = arith.negf %484 : vector<1x32xf32>
    %486 = math.exp %485 : vector<1x32xf32>
    %cst_111 = arith.constant 1.000000e+00 : f32
    %487 = vector.broadcast %cst_111 : f32 to vector<1x32xf32>
    %488 = arith.addf %487, %486 : vector<1x32xf32>
    %489 = arith.divf %487, %488 : vector<1x32xf32>
    %490 = vector.extract_strided_slice %477 {offsets = [0, 64], sizes = [1, 32], strides = [1, 1]} : vector<1x128xf32> to vector<1x32xf32>
    %491 = math.tanh %490 : vector<1x32xf32>
    %492 = vector.extract_strided_slice %477 {offsets = [0, 96], sizes = [1, 32], strides = [1, 1]} : vector<1x128xf32> to vector<1x32xf32>
    %493 = arith.negf %492 : vector<1x32xf32>
    %494 = math.exp %493 : vector<1x32xf32>
    %cst_112 = arith.constant 1.000000e+00 : f32
    %495 = vector.broadcast %cst_112 : f32 to vector<1x32xf32>
    %496 = arith.addf %495, %494 : vector<1x32xf32>
    %497 = arith.divf %495, %496 : vector<1x32xf32>
    %498 = arith.mulf %489, %466 : vector<1x32xf32>
    %499 = arith.mulf %483, %491 : vector<1x32xf32>
    %500 = arith.addf %498, %499 : vector<1x32xf32>
    %501 = math.tanh %500 : vector<1x32xf32>
    %502 = arith.mulf %497, %501 : vector<1x32xf32>
    %503 = arith.truncf %502 : vector<1x32xf32> to vector<1x32xbf16>
    %c0_113 = arith.constant 0 : index
    %c5_114 = arith.constant 5 : index
    %c0_115 = arith.constant 0 : index
    %504 = vector.load %arg10[%c0_113, %c5_114, %c0_115] : memref<1x8x32xbf16, #tpu.memory_space<vmem>>, vector<1x1x32xbf16>
    %505 = vector.shape_cast %504 : vector<1x1x32xbf16> to vector<1x32xbf16>
    %506 = vector.shape_cast %503 : vector<1x32xbf16> to vector<1x1x32xbf16>
    tpu.vector_store %arg10[%c0_113, %c5_114, %c0_115], %506 {strides = array<i32>} : memref<1x8x32xbf16, #tpu.memory_space<vmem>>, vector<1x1x32xbf16>,
    %507 = vector.extract_strided_slice %300 {offsets = [0, 6, 0], sizes = [1, 1, 128], strides = [1, 1, 1]} : vector<1x8x128xf32> to vector<1x1x128xf32>
    %508 = vector.shape_cast %507 : vector<1x1x128xf32> to vector<1x128xf32>
    %509 = arith.truncf %502 : vector<1x32xf32> to vector<1x32xbf16>
    %cst_116 = arith.constant dense<0.000000e+00> : vector<1x128xf32>
    %510 = tpu.matmul %509, %295, %cst_116 {dimension_numbers = #tpu.dot_dimension_numbers<[1], [0], [0], [1], [0, 0, 1, 1], [], []>} : vector<1x32xbf16>, vector<32x128xbf16>, vector<1x128xf32> -> vector<1x128xf32>
    %511 = arith.addf %508, %510 : vector<1x128xf32>
    %512 = vector.extract_strided_slice %511 {offsets = [0, 0], sizes = [1, 32], strides = [1, 1]} : vector<1x128xf32> to vector<1x32xf32>
    %513 = arith.negf %512 : vector<1x32xf32>
    %514 = math.exp %513 : vector<1x32xf32>
    %cst_117 = arith.constant 1.000000e+00 : f32
    %515 = vector.broadcast %cst_117 : f32 to vector<1x32xf32>
    %516 = arith.addf %515, %514 : vector<1x32xf32>
    %517 = arith.divf %515, %516 : vector<1x32xf32>
    %518 = vector.extract_strided_slice %511 {offsets = [0, 32], sizes = [1, 32], strides = [1, 1]} : vector<1x128xf32> to vector<1x32xf32>
    %519 = arith.negf %518 : vector<1x32xf32>
    %520 = math.exp %519 : vector<1x32xf32>
    %cst_118 = arith.constant 1.000000e+00 : f32
    %521 = vector.broadcast %cst_118 : f32 to vector<1x32xf32>
    %522 = arith.addf %521, %520 : vector<1x32xf32>
    %523 = arith.divf %521, %522 : vector<1x32xf32>
    %524 = vector.extract_strided_slice %511 {offsets = [0, 64], sizes = [1, 32], strides = [1, 1]} : vector<1x128xf32> to vector<1x32xf32>
    %525 = math.tanh %524 : vector<1x32xf32>
    %526 = vector.extract_strided_slice %511 {offsets = [0, 96], sizes = [1, 32], strides = [1, 1]} : vector<1x128xf32> to vector<1x32xf32>
    %527 = arith.negf %526 : vector<1x32xf32>
    %528 = math.exp %527 : vector<1x32xf32>
    %cst_119 = arith.constant 1.000000e+00 : f32
    %529 = vector.broadcast %cst_119 : f32 to vector<1x32xf32>
    %530 = arith.addf %529, %528 : vector<1x32xf32>
    %531 = arith.divf %529, %530 : vector<1x32xf32>
    %532 = arith.mulf %523, %500 : vector<1x32xf32>
    %533 = arith.mulf %517, %525 : vector<1x32xf32>
    %534 = arith.addf %532, %533 : vector<1x32xf32>
    %535 = math.tanh %534 : vector<1x32xf32>
    %536 = arith.mulf %531, %535 : vector<1x32xf32>
    %537 = arith.truncf %536 : vector<1x32xf32> to vector<1x32xbf16>
    %c0_120 = arith.constant 0 : index
    %c6_121 = arith.constant 6 : index
    %c0_122 = arith.constant 0 : index
    %538 = vector.load %arg10[%c0_120, %c6_121, %c0_122] : memref<1x8x32xbf16, #tpu.memory_space<vmem>>, vector<1x1x32xbf16>
    %539 = vector.shape_cast %538 : vector<1x1x32xbf16> to vector<1x32xbf16>
    %540 = vector.shape_cast %537 : vector<1x32xbf16> to vector<1x1x32xbf16>
    tpu.vector_store %arg10[%c0_120, %c6_121, %c0_122], %540 {strides = array<i32>} : memref<1x8x32xbf16, #tpu.memory_space<vmem>>, vector<1x1x32xbf16>,
    %541 = vector.extract_strided_slice %300 {offsets = [0, 7, 0], sizes = [1, 1, 128], strides = [1, 1, 1]} : vector<1x8x128xf32> to vector<1x1x128xf32>
    %542 = vector.shape_cast %541 : vector<1x1x128xf32> to vector<1x128xf32>
    %543 = arith.truncf %536 : vector<1x32xf32> to vector<1x32xbf16>
    %cst_123 = arith.constant dense<0.000000e+00> : vector<1x128xf32>
    %544 = tpu.matmul %543, %295, %cst_123 {dimension_numbers = #tpu.dot_dimension_numbers<[1], [0], [0], [1], [0, 0, 1, 1], [], []>} : vector<1x32xbf16>, vector<32x128xbf16>, vector<1x128xf32> -> vector<1x128xf32>
    %545 = arith.addf %542, %544 : vector<1x128xf32>
    %546 = vector.extract_strided_slice %545 {offsets = [0, 0], sizes = [1, 32], strides = [1, 1]} : vector<1x128xf32> to vector<1x32xf32>
    %547 = arith.negf %546 : vector<1x32xf32>
    %548 = math.exp %547 : vector<1x32xf32>
    %cst_124 = arith.constant 1.000000e+00 : f32
    %549 = vector.broadcast %cst_124 : f32 to vector<1x32xf32>
    %550 = arith.addf %549, %548 : vector<1x32xf32>
    %551 = arith.divf %549, %550 : vector<1x32xf32>
    %552 = vector.extract_strided_slice %545 {offsets = [0, 32], sizes = [1, 32], strides = [1, 1]} : vector<1x128xf32> to vector<1x32xf32>
    %553 = arith.negf %552 : vector<1x32xf32>
    %554 = math.exp %553 : vector<1x32xf32>
    %cst_125 = arith.constant 1.000000e+00 : f32
    %555 = vector.broadcast %cst_125 : f32 to vector<1x32xf32>
    %556 = arith.addf %555, %554 : vector<1x32xf32>
    %557 = arith.divf %555, %556 : vector<1x32xf32>
    %558 = vector.extract_strided_slice %545 {offsets = [0, 64], sizes = [1, 32], strides = [1, 1]} : vector<1x128xf32> to vector<1x32xf32>
    %559 = math.tanh %558 : vector<1x32xf32>
    %560 = vector.extract_strided_slice %545 {offsets = [0, 96], sizes = [1, 32], strides = [1, 1]} : vector<1x128xf32> to vector<1x32xf32>
    %561 = arith.negf %560 : vector<1x32xf32>
    %562 = math.exp %561 : vector<1x32xf32>
    %cst_126 = arith.constant 1.000000e+00 : f32
    %563 = vector.broadcast %cst_126 : f32 to vector<1x32xf32>
    %564 = arith.addf %563, %562 : vector<1x32xf32>
    %565 = arith.divf %563, %564 : vector<1x32xf32>
    %566 = arith.mulf %557, %534 : vector<1x32xf32>
    %567 = arith.mulf %551, %559 : vector<1x32xf32>
    %568 = arith.addf %566, %567 : vector<1x32xf32>
    %569 = math.tanh %568 : vector<1x32xf32>
    %570 = arith.mulf %565, %569 : vector<1x32xf32>
    %571 = arith.truncf %570 : vector<1x32xf32> to vector<1x32xbf16>
    %c0_127 = arith.constant 0 : index
    %c7_128 = arith.constant 7 : index
    %c0_129 = arith.constant 0 : index
    %572 = vector.load %arg10[%c0_127, %c7_128, %c0_129] : memref<1x8x32xbf16, #tpu.memory_space<vmem>>, vector<1x1x32xbf16>
    %573 = vector.shape_cast %572 : vector<1x1x32xbf16> to vector<1x32xbf16>
    %574 = vector.shape_cast %571 : vector<1x32xbf16> to vector<1x1x32xbf16>
    tpu.vector_store %arg10[%c0_127, %c7_128, %c0_129], %574 {strides = array<i32>} : memref<1x8x32xbf16, #tpu.memory_space<vmem>>, vector<1x1x32xbf16>,
    return
  }
  func.func @transform_0(%arg0: i32) -> (i32, i32, i32) {
    %c0_i32 = arith.constant 0 : i32
    %c0_i32_0 = arith.constant 0 : i32
    %c0_i32_1 = arith.constant 0 : i32
    return %arg0, %c0_i32, %c0_i32_0 : i32, i32, i32
  }
  func.func @transform_1(%arg0: i32) -> (i32, i32) {
    %c0_i32 = arith.constant 0 : i32
    %c0_i32_0 = arith.constant 0 : i32
    %c0_i32_1 = arith.constant 0 : i32
    return %c0_i32, %c0_i32_0 : i32, i32
  }
  func.func @transform_2(%arg0: i32) -> (i32, i32) {
    %c0_i32 = arith.constant 0 : i32
    %c0_i32_0 = arith.constant 0 : i32
    %c0_i32_1 = arith.constant 0 : i32
    return %c0_i32, %c0_i32_0 : i32, i32
  }
  func.func @transform_3(%arg0: i32) -> (i32, i32) {
    %c0_i32 = arith.constant 0 : i32
    %c0_i32_0 = arith.constant 0 : i32
    %c0_i32_1 = arith.constant 0 : i32
    return %c0_i32, %c0_i32_0 : i32, i32
  }
  func.func @transform_4(%arg0: i32) -> (i32, i32) {
    %c0_i32 = arith.constant 0 : i32
    %c0_i32_0 = arith.constant 0 : i32
    %c0_i32_1 = arith.constant 0 : i32
    return %c0_i32, %c0_i32_0 : i32, i32
  }
  func.func @transform_5(%arg0: i32) -> (i32, i32) {
    %c0_i32 = arith.constant 0 : i32
    %c0_i32_0 = arith.constant 0 : i32
    %c0_i32_1 = arith.constant 0 : i32
    return %c0_i32, %c0_i32_0 : i32, i32
  }
  func.func @transform_6(%arg0: i32) -> (i32, i32) {
    %c0_i32 = arith.constant 0 : i32
    %c0_i32_0 = arith.constant 0 : i32
    %c0_i32_1 = arith.constant 0 : i32
    return %c0_i32, %c0_i32_0 : i32, i32
  }
  func.func @transform_7(%arg0: i32) -> (i32, i32) {
    %c0_i32 = arith.constant 0 : i32
    %c0_i32_0 = arith.constant 0 : i32
    %c0_i32_1 = arith.constant 0 : i32
    return %c0_i32, %c0_i32_0 : i32, i32
  }
  func.func @transform_8(%arg0: i32) -> (i32, i32, i32) {
    %c0_i32 = arith.constant 0 : i32
    %c0_i32_0 = arith.constant 0 : i32
    %c0_i32_1 = arith.constant 0 : i32
    return %arg0, %c0_i32, %c0_i32_0 : i32, i32, i32
  }
  func.func @transform_9(%arg0: i32) -> (i32, i32, i32) {
    %c0_i32 = arith.constant 0 : i32
    %c0_i32_0 = arith.constant 0 : i32
    %c0_i32_1 = arith.constant 0 : i32
    return %arg0, %c0_i32, %c0_i32_0 : i32, i32, i32
  }
}

</mosaic_0001>

<llo_original>
// kernel: tpu_custom_call.1
$region0: #{tpu_custom_call.1}
  #allocation0 [shape = 'u32[]', space=smem, size = 0x4, offset = 0x4, fixed_abs, tag = 'smem constant byte address 0x4 - core index']
  #allocation1 [shape = 'u32[144,128]{1,0:T(1,128)}', space=vmem, size = 0x12000, scoped, tag = 'internal scratch']
  %s0 = inlined_call_operand.vmem [shape: s32[2,8,1], index: 0, kind: input, shape index: {}]
  %s1 = inlined_call_operand.vmem [shape: bf16[64,32], index: 1, kind: input, shape index: {}]
  %s2 = inlined_call_operand.vmem [shape: bf16[32,128], index: 2, kind: input, shape index: {}]
  %s3 = inlined_call_operand.vmem [shape: bf16[32,128], index: 3, kind: input, shape index: {}]
  %s4 = inlined_call_operand.vmem [shape: f32[1,128], index: 4, kind: input, shape index: {}]
  %s5 = inlined_call_operand.vmem [shape: bf16[32,128], index: 5, kind: input, shape index: {}]
  %s6 = inlined_call_operand.vmem [shape: bf16[32,128], index: 6, kind: input, shape index: {}]
  %s7 = inlined_call_operand.vmem [shape: f32[1,128], index: 7, kind: input, shape index: {}]
  %s8 = inlined_call_operand.hbm [shape: bf16[2,8,32], index: 8, kind: output, shape index: {0}]
  %s9 = inlined_call_operand.hbm [shape: bf16[2,8,32], index: 9, kind: output, shape index: {1}]
  %10 = xla_tuple %s8, %s9
  %s11 = sld [smem:[#allocation0]]
  $region73: #{tpu_custom_call.1} parent=0
    _
  %s13 = ssub.s32 1, %s11
  %s14 = scalar_select 0, %s13, %s11
  $region1: #{tpu_custom_call.1} parent=0
    #allocation2 [shape = 'u8[4096]{0}', space=vmem, size = 0x1000, scoped, tag = 'output window, operand 0']
    #allocation3 [shape = 's32[2]{0}', space=sflag, size = 0x8, scoped, tag = 'scoped memory for tpu_custom_call.1']
    #allocation4 [shape = 'u8[4096]{0}', space=vmem, size = 0x1000, scoped, tag = 'output window, operand 1']
    #allocation5 [shape = 's32[2]{0}', space=sflag, size = 0x8, scoped, tag = 'scoped memory for tpu_custom_call.1']
    %15 = vsyncpa [#allocation3], 0
    %s16 = scalar_lea.sflag [#allocation3], 1
    %17 = vsyncpa %s16, 0
    %18 = vsyncpa [#allocation5], 0
    %s19 = scalar_lea.sflag [#allocation5], 1
    %20 = vsyncpa %s19, 0
    loop: start=0, step=1, limit=4
    $region2: #{tpu_custom_call.1} parent=1 // loop_pre_header
      _
    $region3: #{tpu_custom_call.1} parent=1 // loop_header
      %s22 = sphi 0, %s26
      %p23 = scmp.ge.s32.totalorder %s22, 4
      %s32 = sphi 0, %s34
      %s35 = sphi 0, %s32
      %s36 = sphi 0, %s35
      %s52 = sphi 0, %s36
      %s56 = sphi 0, %s56
      %s58 = sphi 0, %s56
      %s59 = sphi 0, %s58
      %s73 = sphi 0, %s59
      %s77 = sphi 0, %s77
      %s79 = sphi 0, %s77
      %s80 = sphi 0, %s79
      %s94 = sphi 0, %s80
      %s98 = sphi 0, %s98
      %s100 = sphi 0, %s98
      %s101 = sphi 0, %s100
      %s115 = sphi 0, %s101
      %s119 = sphi 0, %s119
      %s121 = sphi 0, %s119
      %s122 = sphi 0, %s121
      %s136 = sphi 0, %s122
      %s140 = sphi 0, %s140
      %s142 = sphi 0, %s140
      %s143 = sphi 0, %s142
      %s157 = sphi 0, %s143
      %s161 = sphi 0, %s161
      %s163 = sphi 0, %s161
      %s164 = sphi 0, %s163
      %s178 = sphi 0, %s164
      %s182 = sphi 0, %s182
      %s184 = sphi 0, %s182
      %s185 = sphi 0, %s184
      %s199 = sphi 0, %s185
      %s205 = sphi 0, %s207
      %s208 = sphi 0, %s205
      %s209 = sphi 0, %s208
      %s225 = sphi 0, %s209
      %s231 = sphi 0, %s233
      %s234 = sphi 0, %s231
      %s235 = sphi 0, %s234
      %s251 = sphi 0, %s235
    $region4: #{tpu_custom_call.1} parent=1 // loop_header_branch
      %25 = sbr.rel (%p23) target = $region8
    $region5: #{tpu_custom_call.1} parent=1 // loop_body
      %s27 = ssub.s32 %s22, 1
      %s28 = ssub.s32 %s22, 2
      %s29 = sadd.s32 %s22, 1
      %s30 = ssub.s32 %s22, %s29
      %p31 = scmp.eq.s32.totalorder %s30, 0
      %s33 = sadd.s32 %s32, 1
      %s34 = scalar_select %p31, %s32, %s33
      %p37 = pneg %p31
      %p38 = scmp.eq.s32.totalorder %s22, 1
      %p39 = por %p37, %p38
      %p40 = scmp.ne.s32.totalorder %s32, %s35
      %p41 = scmp.eq.s32.totalorder %s22, 0
      %p42 = por %p40, %p41
      %p43 = scmp.ne.s32.totalorder %s32, %s35
      %p44 = scmp.eq.s32.totalorder %s27, 1
      %p45 = por %p43, %p44
      %p46 = scmp.ne.s32.totalorder %s35, %s36
      %p47 = scmp.eq.s32.totalorder %s27, 0
      %p48 = por %p46, %p47
      %p49 = scmp.ne.s32.totalorder %s35, %s36
      %p50 = scmp.eq.s32.totalorder %s28, 1
      %p51 = por %p49, %p50
      %p53 = scmp.ne.s32.totalorder %s36, %s52
      %p54 = scmp.eq.s32.totalorder %s28, 0
      %p55 = por %p53, %p54
      %s57 = sadd.s32 %s56, 1
      %p60 = scmp.eq.s32.totalorder %s22, 1
      %p61 = scmp.ne.s32.totalorder %s56, %s58
      %p62 = scmp.eq.s32.totalorder %s22, 0
      %p63 = por %p61, %p62
      %p64 = scmp.ne.s32.totalorder %s56, %s58
      %p65 = scmp.eq.s32.totalorder %s27, 1
      %p66 = por %p64, %p65
      %p67 = scmp.ne.s32.totalorder %s58, %s59
      %p68 = scmp.eq.s32.totalorder %s27, 0
      %p69 = por %p67, %p68
      %p70 = scmp.ne.s32.totalorder %s58, %s59
      %p71 = scmp.eq.s32.totalorder %s28, 1
      %p72 = por %p70, %p71
      %p74 = scmp.ne.s32.totalorder %s59, %s73
      %p75 = scmp.eq.s32.totalorder %s28, 0
      %p76 = por %p74, %p75
      %s78 = sadd.s32 %s77, 1
      %p81 = scmp.eq.s32.totalorder %s22, 1
      %p82 = scmp.ne.s32.totalorder %s77, %s79
      %p83 = scmp.eq.s32.totalorder %s22, 0
      %p84 = por %p82, %p83
      %p85 = scmp.ne.s32.totalorder %s77, %s79
      %p86 = scmp.eq.s32.totalorder %s27, 1
      %p87 = por %p85, %p86
      %p88 = scmp.ne.s32.totalorder %s79, %s80
      %p89 = scmp.eq.s32.totalorder %s27, 0
      %p90 = por %p88, %p89
      %p91 = scmp.ne.s32.totalorder %s79, %s80
      %p92 = scmp.eq.s32.totalorder %s28, 1
      %p93 = por %p91, %p92
      %p95 = scmp.ne.s32.totalorder %s80, %s94
      %p96 = scmp.eq.s32.totalorder %s28, 0
      %p97 = por %p95, %p96
      %s99 = sadd.s32 %s98, 1
      %p102 = scmp.eq.s32.totalorder %s22, 1
      %p103 = scmp.ne.s32.totalorder %s98, %s100
      %p104 = scmp.eq.s32.totalorder %s22, 0
      %p105 = por %p103, %p104
      %p106 = scmp.ne.s32.totalorder %s98, %s100
      %p107 = scmp.eq.s32.totalorder %s27, 1
      %p108 = por %p106, %p107
      %p109 = scmp.ne.s32.totalorder %s100, %s101
      %p110 = scmp.eq.s32.totalorder %s27, 0
      %p111 = por %p109, %p110
      %p112 = scmp.ne.s32.totalorder %s100, %s101
      %p113 = scmp.eq.s32.totalorder %s28, 1
      %p114 = por %p112, %p113
      %p116 = scmp.ne.s32.totalorder %s101, %s115
      %p117 = scmp.eq.s32.totalorder %s28, 0
      %p118 = por %p116, %p117
      %s120 = sadd.s32 %s119, 1
      %p123 = scmp.eq.s32.totalorder %s22, 1
      %p124 = scmp.ne.s32.totalorder %s119, %s121
      %p125 = scmp.eq.s32.totalorder %s22, 0
      %p126 = por %p124, %p125
      %p127 = scmp.ne.s32.totalorder %s119, %s121
      %p128 = scmp.eq.s32.totalorder %s27, 1
      %p129 = por %p127, %p128
      %p130 = scmp.ne.s32.totalorder %s121, %s122
      %p131 = scmp.eq.s32.totalorder %s27, 0
      %p132 = por %p130, %p131
      %p133 = scmp.ne.s32.totalorder %s121, %s122
      %p134 = scmp.eq.s32.totalorder %s28, 1
      %p135 = por %p133, %p134
      %p137 = scmp.ne.s32.totalorder %s122, %s136
      %p138 = scmp.eq.s32.totalorder %s28, 0
      %p139 = por %p137, %p138
      %s141 = sadd.s32 %s140, 1
      %p144 = scmp.eq.s32.totalorder %s22, 1
      %p145 = scmp.ne.s32.totalorder %s140, %s142
      %p146 = scmp.eq.s32.totalorder %s22, 0
      %p147 = por %p145, %p146
      %p148 = scmp.ne.s32.totalorder %s140, %s142
      %p149 = scmp.eq.s32.totalorder %s27, 1
      %p150 = por %p148, %p149
      %p151 = scmp.ne.s32.totalorder %s142, %s143
      %p152 = scmp.eq.s32.totalorder %s27, 0
      %p153 = por %p151, %p152
      %p154 = scmp.ne.s32.totalorder %s142, %s143
      %p155 = scmp.eq.s32.totalorder %s28, 1
      %p156 = por %p154, %p155
      %p158 = scmp.ne.s32.totalorder %s143, %s157
      %p159 = scmp.eq.s32.totalorder %s28, 0
      %p160 = por %p158, %p159
      %s162 = sadd.s32 %s161, 1
      %p165 = scmp.eq.s32.totalorder %s22, 1
      %p166 = scmp.ne.s32.totalorder %s161, %s163
      %p167 = scmp.eq.s32.totalorder %s22, 0
      %p168 = por %p166, %p167
      %p169 = scmp.ne.s32.totalorder %s161, %s163
      %p170 = scmp.eq.s32.totalorder %s27, 1
      %p171 = por %p169, %p170
      %p172 = scmp.ne.s32.totalorder %s163, %s164
      %p173 = scmp.eq.s32.totalorder %s27, 0
      %p174 = por %p172, %p173
      %p175 = scmp.ne.s32.totalorder %s163, %s164
      %p176 = scmp.eq.s32.totalorder %s28, 1
      %p177 = por %p175, %p176
      %p179 = scmp.ne.s32.totalorder %s164, %s178
      %p180 = scmp.eq.s32.totalorder %s28, 0
      %p181 = por %p179, %p180
      %s183 = sadd.s32 %s182, 1
      %p186 = scmp.eq.s32.totalorder %s22, 1
      %p187 = scmp.ne.s32.totalorder %s182, %s184
      %p188 = scmp.eq.s32.totalorder %s22, 0
      %p189 = por %p187, %p188
      %p190 = scmp.ne.s32.totalorder %s182, %s184
      %p191 = scmp.eq.s32.totalorder %s27, 1
      %p192 = por %p190, %p191
      %p193 = scmp.ne.s32.totalorder %s184, %s185
      %p194 = scmp.eq.s32.totalorder %s27, 0
      %p195 = por %p193, %p194
      %p196 = scmp.ne.s32.totalorder %s184, %s185
      %p197 = scmp.eq.s32.totalorder %s28, 1
      %p198 = por %p196, %p197
      %p200 = scmp.ne.s32.totalorder %s185, %s199
      %p201 = scmp.eq.s32.totalorder %s28, 0
      %p202 = por %p200, %p201
      %s203 = ssub.s32 %s22, %s29
      %p204 = scmp.eq.s32.totalorder %s203, 0
      %s206 = sadd.s32 %s205, 1
      %s207 = scalar_select %p204, %s205, %s206
      %p210 = pneg %p204
      %p211 = scmp.eq.s32.totalorder %s22, 1
      %p212 = por %p210, %p211
      %p213 = scmp.ne.s32.totalorder %s205, %s208
      %p214 = scmp.eq.s32.totalorder %s22, 0
      %p215 = por %p213, %p214
      %p216 = scmp.ne.s32.totalorder %s205, %s208
      %p217 = scmp.eq.s32.totalorder %s27, 1
      %p218 = por %p216, %p217
      %p219 = scmp.ne.s32.totalorder %s208, %s209
      %p220 = scmp.eq.s32.totalorder %s27, 0
      %p221 = por %p219, %p220
      %p222 = scmp.ne.s32.totalorder %s208, %s209
      %p223 = scmp.eq.s32.totalorder %s28, 1
      %p224 = por %p222, %p223
      %p226 = scmp.ne.s32.totalorder %s209, %s225
      %p227 = scmp.eq.s32.totalorder %s28, 0
      %p228 = por %p226, %p227
      %s229 = ssub.s32 %s22, %s29
      %p230 = scmp.eq.s32.totalorder %s229, 0
      %s232 = sadd.s32 %s231, 1
      %s233 = scalar_select %p230, %s231, %s232
      %p236 = pneg %p230
      %p237 = scmp.eq.s32.totalorder %s22, 1
      %p238 = por %p236, %p237
      %p239 = scmp.ne.s32.totalorder %s231, %s234
      %p240 = scmp.eq.s32.totalorder %s22, 0
      %p241 = por %p239, %p240
      %p242 = scmp.ne.s32.totalorder %s231, %s234
      %p243 = scmp.eq.s32.totalorder %s27, 1
      %p244 = por %p242, %p243
      %p245 = scmp.ne.s32.totalorder %s234, %s235
      %p246 = scmp.eq.s32.totalorder %s27, 0
      %p247 = por %p245, %p246
      %p248 = scmp.ne.s32.totalorder %s234, %s235
      %p249 = scmp.eq.s32.totalorder %s28, 1
      %p250 = por %p248, %p249
      %p252 = scmp.ne.s32.totalorder %s235, %s251
      %p253 = scmp.eq.s32.totalorder %s28, 0
      %p254 = por %p252, %p253
      %p255 = scmp.le.s32.totalorder 1, %s22
      %p256 = scmp.lt.s32.totalorder %s22, 3
      %p257 = pnand %p255, %p256
      %p258 = pneg %p257
      // Predicated region
      $region9: #{tpu_custom_call.1} parent=5 // pred_check
        _
      $region10: #{tpu_custom_call.1} parent=5 // pred_check_branch
        %260 = sbr.rel (%p257) target = $region12
      $region11: #{tpu_custom_call.1} parent=5 // pred_region
        %s261 = ssub.s32 %s22, 1
        // Predicated region
        $region13: #{tpu_custom_call.1} parent=11 // pred_check
          %p262 = pneg %p69
        $region14: #{tpu_custom_call.1} parent=11 // pred_check_branch
          %264 = sbr.rel (%p262) target = $region16
        $region15: #{tpu_custom_call.1} parent=11 // pred_region
          _
        $region16: #{tpu_custom_call.1} parent=11 // pred_fallthru
          _
        // Predicated region
        $region17: #{tpu_custom_call.1} parent=11 // pred_check
          %p265 = pneg %p90
        $region18: #{tpu_custom_call.1} parent=11 // pred_check_branch
          %267 = sbr.rel (%p265) target = $region20
        $region19: #{tpu_custom_call.1} parent=11 // pred_region
          _
        $region20: #{tpu_custom_call.1} parent=11 // pred_fallthru
          _
        // Predicated region
        $region21: #{tpu_custom_call.1} parent=11 // pred_check
          %p268 = pneg %p111
        $region22: #{tpu_custom_call.1} parent=11 // pred_check_branch
          %270 = sbr.rel (%p268) target = $region24
        $region23: #{tpu_custom_call.1} parent=11 // pred_region
          _
        $region24: #{tpu_custom_call.1} parent=11 // pred_fallthru
          _
        // Predicated region
        $region25: #{tpu_custom_call.1} parent=11 // pred_check
          %p271 = pneg %p132
        $region26: #{tpu_custom_call.1} parent=11 // pred_check_branch
          %273 = sbr.rel (%p271) target = $region28
        $region27: #{tpu_custom_call.1} parent=11 // pred_region
          _
        $region28: #{tpu_custom_call.1} parent=11 // pred_fallthru
          _
        // Predicated region
        $region29: #{tpu_custom_call.1} parent=11 // pred_check
          %p274 = pneg %p153
        $region30: #{tpu_custom_call.1} parent=11 // pred_check_branch
          %276 = sbr.rel (%p274) target = $region32
        $region31: #{tpu_custom_call.1} parent=11 // pred_region
          _
        $region32: #{tpu_custom_call.1} parent=11 // pred_fallthru
          _
        // Predicated region
        $region33: #{tpu_custom_call.1} parent=11 // pred_check
          %p277 = pneg %p174
        $region34: #{tpu_custom_call.1} parent=11 // pred_check_branch
          %279 = sbr.rel (%p277) target = $region36
        $region35: #{tpu_custom_call.1} parent=11 // pred_region
          _
        $region36: #{tpu_custom_call.1} parent=11 // pred_fallthru
          _
        // Predicated region
        $region37: #{tpu_custom_call.1} parent=11 // pred_check
          %p280 = pneg %p195
        $region38: #{tpu_custom_call.1} parent=11 // pred_check_branch
          %282 = sbr.rel (%p280) target = $region40
        $region39: #{tpu_custom_call.1} parent=11 // pred_region
          _
        $region40: #{tpu_custom_call.1} parent=11 // pred_fallthru
          _
      $region12: #{tpu_custom_call.1} parent=5 // pred_fallthru
        _
      %p283 = scmp.lt.s32.totalorder %s22, 2
      // Predicated region
      $region41: #{tpu_custom_call.1} parent=5 // pred_check
        %p284 = pneg %p283
      $region42: #{tpu_custom_call.1} parent=5 // pred_check_branch
        %286 = sbr.rel (%p284) target = $region44
      $region43: #{tpu_custom_call.1} parent=5 // pred_region
        // Predicated region
        $region45: #{tpu_custom_call.1} parent=43 // pred_check
          %p287 = pneg %p42
        $region46: #{tpu_custom_call.1} parent=43 // pred_check_branch
          %289 = sbr.rel (%p287) target = $region48
        $region47: #{tpu_custom_call.1} parent=43 // pred_region
          %p290 = scmp.lt.s32.totalorder %s22, 1
          %s291 = scalar_select %p290, %s22, 1
          %s292 = smul.addr %s291, 8
          %s293 = scalar_lea.vmem %s0, %s292
        $region48: #{tpu_custom_call.1} parent=43 // pred_fallthru
          _
      $region44: #{tpu_custom_call.1} parent=5 // pred_fallthru
        _
      %p294 = scmp.le.s32.totalorder 1, %s22
      %p295 = scmp.lt.s32.totalorder %s22, 3
      %p296 = pnand %p294, %p295
      %p297 = pneg %p296
      // Predicated region
      $region49: #{tpu_custom_call.1} parent=5 // pred_check
        _
      $region50: #{tpu_custom_call.1} parent=5 // pred_check_branch
        %299 = sbr.rel (%p296) target = $region52
      $region51: #{tpu_custom_call.1} parent=5 // pred_region
        %s300 = ssub.s32 %s22, 1
        %p301 = scmp.lt.s32.totalorder %s27, 1
        %s302 = scalar_select %p301, %s27, 1
        %s303 = smul.addr %s302, 8
        %s304 = scalar_lea.vmem %s0, %s303
        %p305 = pneg %p48
        %p306 = pneg %p45
        %p307 = pneg %p69
        %p308 = pneg %p66
        %p309 = pneg %p90
        %p310 = pneg %p87
        %p311 = pneg %p111
        %p312 = pneg %p108
        %p313 = pneg %p132
        %p314 = pneg %p129
        %p315 = pneg %p153
        %p316 = pneg %p150
        %p317 = pneg %p174
        %p318 = pneg %p171
        %p319 = pneg %p195
        %p320 = pneg %p192
        %p321 = pneg %p221
        %p322 = pneg %p218
        %s323 = sand.u32 %s208, 1
        %s324 = scalar_lea.sflag [#allocation3], %s323
        %s325 = sand.u32 %s208, 1
        %s326 = smul.addr %s325, 4
        %s327 = scalar_lea.vmem [#allocation2], %s326
        %p328 = pneg %p247
        %p329 = pneg %p244
        %s330 = sand.u32 %s234, 1
        %s331 = scalar_lea.sflag [#allocation5], %s330
        %s332 = sand.u32 %s234, 1
        %s333 = smul.addr %s332, 4
        %s334 = scalar_lea.vmem [#allocation4], %s333
        %p335 = scmp.lt.s32.totalorder %s27, 1
        %s336 = scalar_select %p335, %s27, 1
        %s337 = smul.addr %s336, 8
        %s338 = scalar_lea.vmem %s0, %s337
        %v340 = vld [vmem:[%s338] sm:$0xff]
        %v341 = vlaneseq
        %v342 = vand.u32 %v341, 127
        %343 = vset.pattern.permute.xlu0 0
        %344 = vperm.xlu0 %343, %v340
        %v345 = vpop.permute.xlu0 %344
        %vm346 = vcmp.eq.s32.totalorder %v342, %v345
        %v347 = vsel %vm346, 1, 0
        %v348 = vcvt.s32.f32 %v347
        %v349 = vpack.c.bf16 %v348, %v348
        %v350 = vld [vmem:[%s1] sm:$0xf]
        %v351 = vld [vmem:[%s1 + $0x4] sm:$0xf]
        %v352 = vld [vmem:[%s1 + $0x8] sm:$0xf]
        %v353 = vld [vmem:[%s1 + $0xc] sm:$0xf]
        %v354 = vld [vmem:[%s1 + $0x10] sm:$0xf]
        %v355 = vld [vmem:[%s1 + $0x14] sm:$0xf]
        %v356 = vld [vmem:[%s1 + $0x18] sm:$0xf]
        %v357 = vld [vmem:[%s1 + $0x1c] sm:$0xf]
        %v366 = vunpack.c.l.b16 %v350
        %v367 = vunpack.c.l.b16 %v351
        %v368 = vunpack.c.l.b16 %v352
        %v369 = vunpack.c.l.b16 %v353
        %v370 = vunpack.c.l.b16 %v354
        %v371 = vunpack.c.l.b16 %v355
        %v372 = vunpack.c.l.b16 %v356
        %v373 = vunpack.c.l.b16 %v357
        %v374 = vpack.c.b16 %v367, %v366
        %v375 = vpack.c.b16 %v369, %v368
        %v376 = vpack.c.b16 %v371, %v370
        %v377 = vpack.c.b16 %v373, %v372
        %vm382 = vcmask 523264
        %v384 = vsel %vm382, %v349, 0
        %386 = vmatprep.subr.bf16.mxu0 0
        %387 = vmatpush1.bf16.msra.mxu0 %v374
        %388 = vmatprep.subr.bf16.mxu0 0
        %389 = vmatpush1.bf16.msra.mxu0 %v375
        %390 = vmatprep.subr.bf16.mxu0 0
        %391 = vmatpush1.bf16.msra.mxu0 %v376
        %392 = vmatprep.subr.bf16.mxu0 0
        %393 = vmatpush1.bf16.msra.mxu0 %v377
        %394 = vmatprep.subr.bf16.mxu0 0
        %395 = vmatpush1.bf16.msra.mxu0 0
        %396 = vmatprep.subr.bf16.mxu0 0
        %397 = vmatpush1.bf16.msra.mxu0 0
        %398 = vmatprep.subr.bf16.mxu0 0
        %399 = vmatpush1.bf16.msra.mxu0 0
        %400 = vmatprep.subr.bf16.mxu0 0
        %401 = vmatpush1.bf16.msra.mxu0 0
        %402 = vmatprep.subr.bf16.mxu0 0
        %403 = vmatpush1.bf16.msra.mxu0 0
        %404 = vmatprep.subr.bf16.mxu0 0
        %405 = vmatpush1.bf16.msra.mxu0 0
        %406 = vmatprep.subr.bf16.mxu0 0
        %407 = vmatpush1.bf16.msra.mxu0 0
        %408 = vmatprep.subr.bf16.mxu0 0
        %409 = vmatpush1.bf16.msra.mxu0 0
        %410 = vmatprep.subr.bf16.mxu0 0
        %411 = vmatpush1.bf16.msra.mxu0 0
        %412 = vmatprep.subr.bf16.mxu0 0
        %413 = vmatpush1.bf16.msra.mxu0 0
        %414 = vmatprep.subr.bf16.mxu0 0
        %415 = vmatpush1.bf16.msra.mxu0 0
        %416 = vmatprep.subr.bf16.mxu0 0
        %417 = vmatpush1.bf16.msra.mxu0 0
        %418 = vmatprep.mubr.bf16.mxu0 0
        %419 = vmatmul.mubr.bf16.gmra.mrb[0].mxu0 %v384
        %v420 = vpop.f32.mrb[0].mxu0
        %v421 = vadd.f32 0.0, %v420
        %v422 = vpop.f32.mrb[0].mxu0
        %v423 = vpop.f32.mrb[0].mxu0
        %v424 = vpop.f32.mrb[0].mxu0
        %425 = vdwg.mxu0
        %v426 = vpack.c.bf16 %v421, %v421
        %v427 = vld [vmem:[%s2] sm:$0xf]
        %v428 = vld [vmem:[%s2 + $0x4] sm:$0xf]
        %v429 = vld [vmem:[%s2 + $0x8] sm:$0xf]
        %v430 = vld [vmem:[%s2 + $0xc] sm:$0xf]
        %v431 = vld [vmem:[%s3] sm:$0xf]
        %v432 = vld [vmem:[%s3 + $0x4] sm:$0xf]
        %v433 = vld [vmem:[%s3 + $0x8] sm:$0xf]
        %v434 = vld [vmem:[%s3 + $0xc] sm:$0xf]
        %v435 = vld [vmem:[%s4] sm:$0x1]
        %v437 = vlaneseq
        %v438 = vshrl.u32 %v437, 7
        %v439 = vsub.s32 0, %v438
        %v440 = vrot.slane %v435, %v439
        %v446 = vunpack.c.l.b16 %v427
        %v447 = vunpack.c.l.b16 %v428
        %v448 = vunpack.c.l.b16 %v429
        %v449 = vunpack.c.l.b16 %v430
        %v450 = vpack.c.b16 %v447, %v446
        %v451 = vpack.c.b16 %v449, %v448
        %vm454 = vcmask 261120
        %v456 = vsel %vm454, %v426, 0
        %458 = vmatprep.subr.bf16.mxu0 0
        %459 = vmatpush1.bf16.msra.mxu0 %v450
        %460 = vmatprep.subr.bf16.mxu0 0
        %461 = vmatpush1.bf16.msra.mxu0 %v451
        %462 = vmatprep.subr.bf16.mxu0 0
        %463 = vmatpush1.bf16.msra.mxu0 0
        %464 = vmatprep.subr.bf16.mxu0 0
        %465 = vmatpush1.bf16.msra.mxu0 0
        %466 = vmatprep.subr.bf16.mxu0 0
        %467 = vmatpush1.bf16.msra.mxu0 0
        %468 = vmatprep.subr.bf16.mxu0 0
        %469 = vmatpush1.bf16.msra.mxu0 0
        %470 = vmatprep.subr.bf16.mxu0 0
        %471 = vmatpush1.bf16.msra.mxu0 0
        %472 = vmatprep.subr.bf16.mxu0 0
        %473 = vmatpush1.bf16.msra.mxu0 0
        %474 = vmatprep.subr.bf16.mxu0 0
        %475 = vmatpush1.bf16.msra.mxu0 0
        %476 = vmatprep.subr.bf16.mxu0 0
        %477 = vmatpush1.bf16.msra.mxu0 0
        %478 = vmatprep.subr.bf16.mxu0 0
        %479 = vmatpush1.bf16.msra.mxu0 0
        %480 = vmatprep.subr.bf16.mxu0 0
        %481 = vmatpush1.bf16.msra.mxu0 0
        %482 = vmatprep.subr.bf16.mxu0 0
        %483 = vmatpush1.bf16.msra.mxu0 0
        %484 = vmatprep.subr.bf16.mxu0 0
        %485 = vmatpush1.bf16.msra.mxu0 0
        %486 = vmatprep.subr.bf16.mxu0 0
        %487 = vmatpush1.bf16.msra.mxu0 0
        %488 = vmatprep.subr.bf16.mxu0 0
        %489 = vmatpush1.bf16.msra.mxu0 0
        %490 = vmatprep.mubr.bf16.mxu0 0
        %491 = vmatmul.mubr.bf16.gmra.mrb[0].mxu0 %v456
        %v492 = vpop.f32.mrb[0].mxu0
        %v493 = vadd.f32 %v440, %v492
        %v494 = vpop.f32.mrb[0].mxu0
        %v495 = vpop.f32.mrb[0].mxu0
        %v496 = vpop.f32.mrb[0].mxu0
        %497 = vdwg.mxu0
        %v502 = vunpack.c.l.b16 %v431
        %v503 = vunpack.c.l.b16 %v432
        %v504 = vunpack.c.l.b16 %v433
        %v505 = vunpack.c.l.b16 %v434
        %v506 = vpack.c.b16 %v503, %v502
        %v507 = vpack.c.b16 %v505, %v504
        %v511 = vsel %vm454, 0, 0
        %513 = vmatprep.subr.bf16.mxu0 0
        %514 = vmatpush1.bf16.msra.mxu0 %v506
        %515 = vmatprep.subr.bf16.mxu0 0
        %516 = vmatpush1.bf16.msra.mxu0 %v507
        %517 = vmatprep.subr.bf16.mxu0 0
        %518 = vmatpush1.bf16.msra.mxu0 0
        %519 = vmatprep.subr.bf16.mxu0 0
        %520 = vmatpush1.bf16.msra.mxu0 0
        %521 = vmatprep.subr.bf16.mxu0 0
        %522 = vmatpush1.bf16.msra.mxu0 0
        %523 = vmatprep.subr.bf16.mxu0 0
        %524 = vmatpush1.bf16.msra.mxu0 0
        %525 = vmatprep.subr.bf16.mxu0 0
        %526 = vmatpush1.bf16.msra.mxu0 0
        %527 = vmatprep.subr.bf16.mxu0 0
        %528 = vmatpush1.bf16.msra.mxu0 0
        %529 = vmatprep.subr.bf16.mxu0 0
        %530 = vmatpush1.bf16.msra.mxu0 0
        %531 = vmatprep.subr.bf16.mxu0 0
        %532 = vmatpush1.bf16.msra.mxu0 0
        %533 = vmatprep.subr.bf16.mxu0 0
        %534 = vmatpush1.bf16.msra.mxu0 0
        %535 = vmatprep.subr.bf16.mxu0 0
        %536 = vmatpush1.bf16.msra.mxu0 0
        %537 = vmatprep.subr.bf16.mxu0 0
        %538 = vmatpush1.bf16.msra.mxu0 0
        %539 = vmatprep.subr.bf16.mxu0 0
        %540 = vmatpush1.bf16.msra.mxu0 0
        %541 = vmatprep.subr.bf16.mxu0 0
        %542 = vmatpush1.bf16.msra.mxu0 0
        %543 = vmatprep.subr.bf16.mxu0 0
        %544 = vmatpush1.bf16.msra.mxu0 0
        %545 = vmatprep.mubr.bf16.mxu0 0
        %546 = vmatmul.mubr.bf16.gmra.mrb[0].mxu0 %v511
        %v547 = vpop.f32.mrb[0].mxu0
        %v548 = vadd.f32 0.0, %v547
        %v549 = vpop.f32.mrb[0].mxu0
        %v550 = vpop.f32.mrb[0].mxu0
        %v551 = vpop.f32.mrb[0].mxu0
        %552 = vdwg.mxu0
        %v553 = vadd.f32 %v493, %v548
        %v554 = vxor.u32 %v553, 2147483648
        %v555 = vmul.f32 %v554, 1.442695
        %v556 = vpow.pop %v555
        %v557 = vadd.f32 %v556, 1.0
        %v558 = vrcp.pop %v557
        %v559 = vmul.f32 1.0, %v558
        %v560 = vtanh.pop %v553
        %v561 = vmul.f32 %v559, 0.0
        %563 = vrot.lane.b32.xlu0 %v560, 64
        %v564 = vpop.permute.xlu0 %563
        %v566 = vmul.f32 %v559, %v564
        %568 = vrot.lane.b32.xlu0 %v566, 32
        %v569 = vpop.permute.xlu0 %568
        %v571 = vadd.f32 %v561, %v569
        %v572 = vtanh.pop %v571
        %574 = vrot.lane.b32.xlu0 %v572, 64
        %v575 = vpop.permute.xlu0 %574
        %v577 = vmul.f32 %v559, %v575
        %v578 = vpack.c.bf16 %v577, %v577
        %v580 = vunpack.c.l.b16 %v578
        %v581 = vpack.c.b16 %v580, %v580
        %582 = vrot.lane.b32.xlu0 %v581, 32
        %v583 = vpop.permute.xlu0 %582
        %vm585 = vcmask 253952
        %vm586 = vsmask.f32 256
        %vm587 = vmand %vm585, %vm586
        %v588 = vld [vmem:[%s327] sm:$0x1]
        %v589 = vsel %vm587, %v583, %v588
        %590 = vst [vmem:[%s327] sm:$0x1] %v589
        %591 = vrot.lane.b32.xlu0 %v578, 32
        %v592 = vpop.permute.xlu0 %591
        %v594 = vsel %vm454, %v592, 0
        %596 = vmatprep.subr.bf16.mxu0 0
        %597 = vmatpush1.bf16.msra.mxu0 %v506
        %598 = vmatprep.subr.bf16.mxu0 0
        %599 = vmatpush1.bf16.msra.mxu0 %v507
        %600 = vmatprep.subr.bf16.mxu0 0
        %601 = vmatpush1.bf16.msra.mxu0 0
        %602 = vmatprep.subr.bf16.mxu0 0
        %603 = vmatpush1.bf16.msra.mxu0 0
        %604 = vmatprep.subr.bf16.mxu0 0
        %605 = vmatpush1.bf16.msra.mxu0 0
        %606 = vmatprep.subr.bf16.mxu0 0
        %607 = vmatpush1.bf16.msra.mxu0 0
        %608 = vmatprep.subr.bf16.mxu0 0
        %609 = vmatpush1.bf16.msra.mxu0 0
        %610 = vmatprep.subr.bf16.mxu0 0
        %611 = vmatpush1.bf16.msra.mxu0 0
        %612 = vmatprep.subr.bf16.mxu0 0
        %613 = vmatpush1.bf16.msra.mxu0 0
        %614 = vmatprep.subr.bf16.mxu0 0
        %615 = vmatpush1.bf16.msra.mxu0 0
        %616 = vmatprep.subr.bf16.mxu0 0
        %617 = vmatpush1.bf16.msra.mxu0 0
        %618 = vmatprep.subr.bf16.mxu0 0
        %619 = vmatpush1.bf16.msra.mxu0 0
        %620 = vmatprep.subr.bf16.mxu0 0
        %621 = vmatpush1.bf16.msra.mxu0 0
        %622 = vmatprep.subr.bf16.mxu0 0
        %623 = vmatpush1.bf16.msra.mxu0 0
        %624 = vmatprep.subr.bf16.mxu0 0
        %625 = vmatpush1.bf16.msra.mxu0 0
        %626 = vmatprep.subr.bf16.mxu0 0
        %627 = vmatpush1.bf16.msra.mxu0 0
        %628 = vmatprep.mubr.bf16.mxu0 0
        %629 = vmatmul.mubr.bf16.gmra.mrb[0].mxu0 %v594
        %v630 = vpop.f32.mrb[0].mxu0
        %v631 = vadd.f32 0.0, %v630
        %v632 = vpop.f32.mrb[0].mxu0
        %v633 = vpop.f32.mrb[0].mxu0
        %v634 = vpop.f32.mrb[0].mxu0
        %635 = vdwg.mxu0
        %v637 = vrot.slane %v631, 7
        %v639 = vadd.f32 %v493, %v637
        %v640 = vxor.u32 %v639, 2147483648
        %v641 = vmul.f32 %v640, 1.442695
        %v642 = vpow.pop %v641
        %v643 = vadd.f32 %v642, 1.0
        %v644 = vrcp.pop %v643
        %v645 = vmul.f32 1.0, %v644
        %v646 = vtanh.pop %v639
        %v648 = vrot.slane %v571, 7
        %v650 = vmul.f32 %v645, %v648
        %652 = vrot.lane.b32.xlu0 %v646, 64
        %v653 = vpop.permute.xlu0 %652
        %v655 = vmul.f32 %v645, %v653
        %657 = vrot.lane.b32.xlu0 %v655, 32
        %v658 = vpop.permute.xlu0 %657
        %v660 = vadd.f32 %v650, %v658
        %v661 = vtanh.pop %v660
        %663 = vrot.lane.b32.xlu0 %v661, 64
        %v664 = vpop.permute.xlu0 %663
        %v666 = vmul.f32 %v645, %v664
        %v667 = vpack.c.bf16 %v666, %v666
        %v669 = vunpack.c.l.b16 %v667
        %v670 = vpack.c.b16 %v669, %v669
        %671 = vrot.lane.b32.xlu0 %v670, 32
        %v672 = vpop.permute.xlu0 %671
        %vm674 = vsmask.f32 7938
        %vm675 = vmand %vm585, %vm674
        %v676 = vld [vmem:[%s327] sm:$0x1]
        %v677 = vsel %vm675, %v672, %v676
        %678 = vst [vmem:[%s327] sm:$0x1] %v677
        %v680 = vshrl.u32 %v667, 16
        %682 = vrot.lane.b32.xlu0 %v680, 32
        %v683 = vpop.permute.xlu0 %682
        %v685 = vsel %vm454, %v683, 0
        %687 = vmatprep.subr.bf16.mxu0 0
        %688 = vmatpush1.bf16.msra.mxu0 %v506
        %689 = vmatprep.subr.bf16.mxu0 0
        %690 = vmatpush1.bf16.msra.mxu0 %v507
        %691 = vmatprep.subr.bf16.mxu0 0
        %692 = vmatpush1.bf16.msra.mxu0 0
        %693 = vmatprep.subr.bf16.mxu0 0
        %694 = vmatpush1.bf16.msra.mxu0 0
        %695 = vmatprep.subr.bf16.mxu0 0
        %696 = vmatpush1.bf16.msra.mxu0 0
        %697 = vmatprep.subr.bf16.mxu0 0
        %698 = vmatpush1.bf16.msra.mxu0 0
        %699 = vmatprep.subr.bf16.mxu0 0
        %700 = vmatpush1.bf16.msra.mxu0 0
        %701 = vmatprep.subr.bf16.mxu0 0
        %702 = vmatpush1.bf16.msra.mxu0 0
        %703 = vmatprep.subr.bf16.mxu0 0
        %704 = vmatpush1.bf16.msra.mxu0 0
        %705 = vmatprep.subr.bf16.mxu0 0
        %706 = vmatpush1.bf16.msra.mxu0 0
        %707 = vmatprep.subr.bf16.mxu0 0
        %708 = vmatpush1.bf16.msra.mxu0 0
        %709 = vmatprep.subr.bf16.mxu0 0
        %710 = vmatpush1.bf16.msra.mxu0 0
        %711 = vmatprep.subr.bf16.mxu0 0
        %712 = vmatpush1.bf16.msra.mxu0 0
        %713 = vmatprep.subr.bf16.mxu0 0
        %714 = vmatpush1.bf16.msra.mxu0 0
        %715 = vmatprep.subr.bf16.mxu0 0
        %716 = vmatpush1.bf16.msra.mxu0 0
        %717 = vmatprep.subr.bf16.mxu0 0
        %718 = vmatpush1.bf16.msra.mxu0 0
        %719 = vmatprep.mubr.bf16.mxu0 0
        %720 = vmatmul.mubr.bf16.gmra.mrb[0].mxu0 %v685
        %v721 = vpop.f32.mrb[0].mxu0
        %v722 = vadd.f32 0.0, %v721
        %v723 = vpop.f32.mrb[0].mxu0
        %v724 = vpop.f32.mrb[0].mxu0
        %v725 = vpop.f32.mrb[0].mxu0
        %726 = vdwg.mxu0
        %v728 = vrot.slane %v722, 6
        %v730 = vadd.f32 %v493, %v728
        %v731 = vxor.u32 %v730, 2147483648
        %v732 = vmul.f32 %v731, 1.442695
        %v733 = vpow.pop %v732
        %v734 = vadd.f32 %v733, 1.0
        %v735 = vrcp.pop %v734
        %v736 = vmul.f32 1.0, %v735
        %v737 = vtanh.pop %v730
        %v739 = vrot.slane %v660, 7
        %v741 = vmul.f32 %v736, %v739
        %743 = vrot.lane.b32.xlu0 %v737, 64
        %v744 = vpop.permute.xlu0 %743
        %v746 = vmul.f32 %v736, %v744
        %748 = vrot.lane.b32.xlu0 %v746, 32
        %v749 = vpop.permute.xlu0 %748
        %v751 = vadd.f32 %v741, %v749
        %v752 = vtanh.pop %v751
        %754 = vrot.lane.b32.xlu0 %v752, 64
        %v755 = vpop.permute.xlu0 %754
        %v757 = vmul.f32 %v736, %v755
        %v758 = vpack.c.bf16 %v757, %v757
        %v760 = vunpack.c.l.b16 %v758
        %v761 = vpack.c.b16 %v760, %v760
        %762 = vrot.lane.b32.xlu0 %v761, 32
        %v763 = vpop.permute.xlu0 %762
        %vm765 = vcmask 254977
        %vm766 = vsmask.f32 1280
        %vm767 = vmand %vm765, %vm766
        %v768 = vld [vmem:[%s327] sm:$0x2]
        %v769 = vsel %vm767, %v763, %v768
        %770 = vst [vmem:[%s327] sm:$0x2] %v769
        %v771 = vrot.slane %v758, 1
        %772 = vrot.lane.b32.xlu0 %v771, 32
        %v773 = vpop.permute.xlu0 %772
        %v775 = vsel %vm454, %v773, 0
        %777 = vmatprep.subr.bf16.mxu0 0
        %778 = vmatpush1.bf16.msra.mxu0 %v506
        %779 = vmatprep.subr.bf16.mxu0 0
        %780 = vmatpush1.bf16.msra.mxu0 %v507
        %781 = vmatprep.subr.bf16.mxu0 0
        %782 = vmatpush1.bf16.msra.mxu0 0
        %783 = vmatprep.subr.bf16.mxu0 0
        %784 = vmatpush1.bf16.msra.mxu0 0
        %785 = vmatprep.subr.bf16.mxu0 0
        %786 = vmatpush1.bf16.msra.mxu0 0
        %787 = vmatprep.subr.bf16.mxu0 0
        %788 = vmatpush1.bf16.msra.mxu0 0
        %789 = vmatprep.subr.bf16.mxu0 0
        %790 = vmatpush1.bf16.msra.mxu0 0
        %791 = vmatprep.subr.bf16.mxu0 0
        %792 = vmatpush1.bf16.msra.mxu0 0
        %793 = vmatprep.subr.bf16.mxu0 0
        %794 = vmatpush1.bf16.msra.mxu0 0
        %795 = vmatprep.subr.bf16.mxu0 0
        %796 = vmatpush1.bf16.msra.mxu0 0
        %797 = vmatprep.subr.bf16.mxu0 0
        %798 = vmatpush1.bf16.msra.mxu0 0
        %799 = vmatprep.subr.bf16.mxu0 0
        %800 = vmatpush1.bf16.msra.mxu0 0
        %801 = vmatprep.subr.bf16.mxu0 0
        %802 = vmatpush1.bf16.msra.mxu0 0
        %803 = vmatprep.subr.bf16.mxu0 0
        %804 = vmatpush1.bf16.msra.mxu0 0
        %805 = vmatprep.subr.bf16.mxu0 0
        %806 = vmatpush1.bf16.msra.mxu0 0
        %807 = vmatprep.subr.bf16.mxu0 0
        %808 = vmatpush1.bf16.msra.mxu0 0
        %809 = vmatprep.mubr.bf16.mxu0 0
        %810 = vmatmul.mubr.bf16.gmra.mrb[0].mxu0 %v775
        %v811 = vpop.f32.mrb[0].mxu0
        %v812 = vadd.f32 0.0, %v811
        %v813 = vpop.f32.mrb[0].mxu0
        %v814 = vpop.f32.mrb[0].mxu0
        %v815 = vpop.f32.mrb[0].mxu0
        %816 = vdwg.mxu0
        %v818 = vrot.slane %v812, 5
        %v820 = vadd.f32 %v493, %v818
        %v821 = vxor.u32 %v820, 2147483648
        %v822 = vmul.f32 %v821, 1.442695
        %v823 = vpow.pop %v822
        %v824 = vadd.f32 %v823, 1.0
        %v825 = vrcp.pop %v824
        %v826 = vmul.f32 1.0, %v825
        %v827 = vtanh.pop %v820
        %v829 = vrot.slane %v751, 7
        %v831 = vmul.f32 %v826, %v829
        %833 = vrot.lane.b32.xlu0 %v827, 64
        %v834 = vpop.permute.xlu0 %833
        %v836 = vmul.f32 %v826, %v834
        %838 = vrot.lane.b32.xlu0 %v836, 32
        %v839 = vpop.permute.xlu0 %838
        %v841 = vadd.f32 %v831, %v839
        %v842 = vtanh.pop %v841
        %844 = vrot.lane.b32.xlu0 %v842, 64
        %v845 = vpop.permute.xlu0 %844
        %v847 = vmul.f32 %v826, %v845
        %v848 = vpack.c.bf16 %v847, %v847
        %v850 = vunpack.c.l.b16 %v848
        %v851 = vpack.c.b16 %v850, %v850
        %852 = vrot.lane.b32.xlu0 %v851, 32
        %v853 = vpop.permute.xlu0 %852
        %vm855 = vsmask.f32 7942
        %vm856 = vmand %vm765, %vm855
        %v857 = vld [vmem:[%s327] sm:$0x2]
        %v858 = vsel %vm856, %v853, %v857
        %859 = vst [vmem:[%s327] sm:$0x2] %v858
        %v861 = vshrl.u32 %v848, 16
        %v863 = vrot.slane %v861, 1
        %864 = vrot.lane.b32.xlu0 %v863, 32
        %v865 = vpop.permute.xlu0 %864
        %v867 = vsel %vm454, %v865, 0
        %869 = vmatprep.subr.bf16.mxu0 0
        %870 = vmatpush1.bf16.msra.mxu0 %v506
        %871 = vmatprep.subr.bf16.mxu0 0
        %872 = vmatpush1.bf16.msra.mxu0 %v507
        %873 = vmatprep.subr.bf16.mxu0 0
        %874 = vmatpush1.bf16.msra.mxu0 0
        %875 = vmatprep.subr.bf16.mxu0 0
        %876 = vmatpush1.bf16.msra.mxu0 0
        %877 = vmatprep.subr.bf16.mxu0 0
        %878 = vmatpush1.bf16.msra.mxu0 0
        %879 = vmatprep.subr.bf16.mxu0 0
        %880 = vmatpush1.bf16.msra.mxu0 0
        %881 = vmatprep.subr.bf16.mxu0 0
        %882 = vmatpush1.bf16.msra.mxu0 0
        %883 = vmatprep.subr.bf16.mxu0 0
        %884 = vmatpush1.bf16.msra.mxu0 0
        %885 = vmatprep.subr.bf16.mxu0 0
        %886 = vmatpush1.bf16.msra.mxu0 0
        %887 = vmatprep.subr.bf16.mxu0 0
        %888 = vmatpush1.bf16.msra.mxu0 0
        %889 = vmatprep.subr.bf16.mxu0 0
        %890 = vmatpush1.bf16.msra.mxu0 0
        %891 = vmatprep.subr.bf16.mxu0 0
        %892 = vmatpush1.bf16.msra.mxu0 0
        %893 = vmatprep.subr.bf16.mxu0 0
        %894 = vmatpush1.bf16.msra.mxu0 0
        %895 = vmatprep.subr.bf16.mxu0 0
        %896 = vmatpush1.bf16.msra.mxu0 0
        %897 = vmatprep.subr.bf16.mxu0 0
        %898 = vmatpush1.bf16.msra.mxu0 0
        %899 = vmatprep.subr.bf16.mxu0 0
        %900 = vmatpush1.bf16.msra.mxu0 0
        %901 = vmatprep.mubr.bf16.mxu0 0
        %902 = vmatmul.mubr.bf16.gmra.mrb[0].mxu0 %v867
        %v903 = vpop.f32.mrb[0].mxu0
        %v904 = vadd.f32 0.0, %v903
        %v905 = vpop.f32.mrb[0].mxu0
        %v906 = vpop.f32.mrb[0].mxu0
        %v907 = vpop.f32.mrb[0].mxu0
        %908 = vdwg.mxu0
        %v910 = vrot.slane %v904, 4
        %v912 = vadd.f32 %v493, %v910
        %v913 = vxor.u32 %v912, 2147483648
        %v914 = vmul.f32 %v913, 1.442695
        %v915 = vpow.pop %v914
        %v916 = vadd.f32 %v915, 1.0
        %v917 = vrcp.pop %v916
        %v918 = vmul.f32 1.0, %v917
        %v919 = vtanh.pop %v912
        %v921 = vrot.slane %v841, 7
        %v923 = vmul.f32 %v918, %v921
        %925 = vrot.lane.b32.xlu0 %v919, 64
        %v926 = vpop.permute.xlu0 %925
        %v928 = vmul.f32 %v918, %v926
        %930 = vrot.lane.b32.xlu0 %v928, 32
        %v931 = vpop.permute.xlu0 %930
        %v933 = vadd.f32 %v923, %v931
        %v934 = vtanh.pop %v933
        %936 = vrot.lane.b32.xlu0 %v934, 64
        %v937 = vpop.permute.xlu0 %936
        %v939 = vmul.f32 %v918, %v937
        %v940 = vpack.c.bf16 %v939, %v939
        %v942 = vunpack.c.l.b16 %v940
        %v943 = vpack.c.b16 %v942, %v942
        %944 = vrot.lane.b32.xlu0 %v943, 32
        %v945 = vpop.permute.xlu0 %944
        %vm947 = vcmask 256002
        %vm948 = vsmask.f32 2304
        %vm949 = vmand %vm947, %vm948
        %v950 = vld [vmem:[%s327] sm:$0x4]
        %v951 = vsel %vm949, %v945, %v950
        %952 = vst [vmem:[%s327] sm:$0x4] %v951
        %v953 = vrot.slane %v940, 2
        %954 = vrot.lane.b32.xlu0 %v953, 32
        %v955 = vpop.permute.xlu0 %954
        %v957 = vsel %vm454, %v955, 0
        %959 = vmatprep.subr.bf16.mxu0 0
        %960 = vmatpush1.bf16.msra.mxu0 %v506
        %961 = vmatprep.subr.bf16.mxu0 0
        %962 = vmatpush1.bf16.msra.mxu0 %v507
        %963 = vmatprep.subr.bf16.mxu0 0
        %964 = vmatpush1.bf16.msra.mxu0 0
        %965 = vmatprep.subr.bf16.mxu0 0
        %966 = vmatpush1.bf16.msra.mxu0 0
        %967 = vmatprep.subr.bf16.mxu0 0
        %968 = vmatpush1.bf16.msra.mxu0 0
        %969 = vmatprep.subr.bf16.mxu0 0
        %970 = vmatpush1.bf16.msra.mxu0 0
        %971 = vmatprep.subr.bf16.mxu0 0
        %972 = vmatpush1.bf16.msra.mxu0 0
        %973 = vmatprep.subr.bf16.mxu0 0
        %974 = vmatpush1.bf16.msra.mxu0 0
        %975 = vmatprep.subr.bf16.mxu0 0
        %976 = vmatpush1.bf16.msra.mxu0 0
        %977 = vmatprep.subr.bf16.mxu0 0
        %978 = vmatpush1.bf16.msra.mxu0 0
        %979 = vmatprep.subr.bf16.mxu0 0
        %980 = vmatpush1.bf16.msra.mxu0 0
        %981 = vmatprep.subr.bf16.mxu0 0
        %982 = vmatpush1.bf16.msra.mxu0 0
        %983 = vmatprep.subr.bf16.mxu0 0
        %984 = vmatpush1.bf16.msra.mxu0 0
        %985 = vmatprep.subr.bf16.mxu0 0
        %986 = vmatpush1.bf16.msra.mxu0 0
        %987 = vmatprep.subr.bf16.mxu0 0
        %988 = vmatpush1.bf16.msra.mxu0 0
        %989 = vmatprep.subr.bf16.mxu0 0
        %990 = vmatpush1.bf16.msra.mxu0 0
        %991 = vmatprep.mubr.bf16.mxu0 0
        %992 = vmatmul.mubr.bf16.gmra.mrb[0].mxu0 %v957
        %v993 = vpop.f32.mrb[0].mxu0
        %v994 = vadd.f32 0.0, %v993
        %v995 = vpop.f32.mrb[0].mxu0
        %v996 = vpop.f32.mrb[0].mxu0
        %v997 = vpop.f32.mrb[0].mxu0
        %998 = vdwg.mxu0
        %v1000 = vrot.slane %v994, 3
        %v1002 = vadd.f32 %v493, %v1000
        %v1003 = vxor.u32 %v1002, 2147483648
        %v1004 = vmul.f32 %v1003, 1.442695
        %v1005 = vpow.pop %v1004
        %v1006 = vadd.f32 %v1005, 1.0
        %v1007 = vrcp.pop %v1006
        %v1008 = vmul.f32 1.0, %v1007
        %v1009 = vtanh.pop %v1002
        %v1011 = vrot.slane %v933, 7
        %v1013 = vmul.f32 %v1008, %v1011
        %1015 = vrot.lane.b32.xlu0 %v1009, 64
        %v1016 = vpop.permute.xlu0 %1015
        %v1018 = vmul.f32 %v1008, %v1016
        %1020 = vrot.lane.b32.xlu0 %v1018, 32
        %v1021 = vpop.permute.xlu0 %1020
        %v1023 = vadd.f32 %v1013, %v1021
        %v1024 = vtanh.pop %v1023
        %1026 = vrot.lane.b32.xlu0 %v1024, 64
        %v1027 = vpop.permute.xlu0 %1026
        %v1029 = vmul.f32 %v1008, %v1027
        %v1030 = vpack.c.bf16 %v1029, %v1029
        %v1032 = vunpack.c.l.b16 %v1030
        %v1033 = vpack.c.b16 %v1032, %v1032
        %1034 = vrot.lane.b32.xlu0 %v1033, 32
        %v1035 = vpop.permute.xlu0 %1034
        %vm1037 = vsmask.f32 7946
        %vm1038 = vmand %vm947, %vm1037
        %v1039 = vld [vmem:[%s327] sm:$0x4]
        %v1040 = vsel %vm1038, %v1035, %v1039
        %1041 = vst [vmem:[%s327] sm:$0x4] %v1040
        %v1043 = vshrl.u32 %v1030, 16
        %v1045 = vrot.slane %v1043, 2
        %1046 = vrot.lane.b32.xlu0 %v1045, 32
        %v1047 = vpop.permute.xlu0 %1046
        %v1049 = vsel %vm454, %v1047, 0
        %1051 = vmatprep.subr.bf16.mxu0 0
        %1052 = vmatpush1.bf16.msra.mxu0 %v506
        %1053 = vmatprep.subr.bf16.mxu0 0
        %1054 = vmatpush1.bf16.msra.mxu0 %v507
        %1055 = vmatprep.subr.bf16.mxu0 0
        %1056 = vmatpush1.bf16.msra.mxu0 0
        %1057 = vmatprep.subr.bf16.mxu0 0
        %1058 = vmatpush1.bf16.msra.mxu0 0
        %1059 = vmatprep.subr.bf16.mxu0 0
        %1060 = vmatpush1.bf16.msra.mxu0 0
        %1061 = vmatprep.subr.bf16.mxu0 0
        %1062 = vmatpush1.bf16.msra.mxu0 0
        %1063 = vmatprep.subr.bf16.mxu0 0
        %1064 = vmatpush1.bf16.msra.mxu0 0
        %1065 = vmatprep.subr.bf16.mxu0 0
        %1066 = vmatpush1.bf16.msra.mxu0 0
        %1067 = vmatprep.subr.bf16.mxu0 0
        %1068 = vmatpush1.bf16.msra.mxu0 0
        %1069 = vmatprep.subr.bf16.mxu0 0
        %1070 = vmatpush1.bf16.msra.mxu0 0
        %1071 = vmatprep.subr.bf16.mxu0 0
        %1072 = vmatpush1.bf16.msra.mxu0 0
        %1073 = vmatprep.subr.bf16.mxu0 0
        %1074 = vmatpush1.bf16.msra.mxu0 0
        %1075 = vmatprep.subr.bf16.mxu0 0
        %1076 = vmatpush1.bf16.msra.mxu0 0
        %1077 = vmatprep.subr.bf16.mxu0 0
        %1078 = vmatpush1.bf16.msra.mxu0 0
        %1079 = vmatprep.subr.bf16.mxu0 0
        %1080 = vmatpush1.bf16.msra.mxu0 0
        %1081 = vmatprep.subr.bf16.mxu0 0
        %1082 = vmatpush1.bf16.msra.mxu0 0
        %1083 = vmatprep.mubr.bf16.mxu0 0
        %1084 = vmatmul.mubr.bf16.gmra.mrb[0].mxu0 %v1049
        %v1085 = vpop.f32.mrb[0].mxu0
        %v1086 = vadd.f32 0.0, %v1085
        %v1087 = vpop.f32.mrb[0].mxu0
        %v1088 = vpop.f32.mrb[0].mxu0
        %v1089 = vpop.f32.mrb[0].mxu0
        %1090 = vdwg.mxu0
        %v1092 = vrot.slane %v1086, 2
        %v1094 = vadd.f32 %v493, %v1092
        %v1095 = vxor.u32 %v1094, 2147483648
        %v1096 = vmul.f32 %v1095, 1.442695
        %v1097 = vpow.pop %v1096
        %v1098 = vadd.f32 %v1097, 1.0
        %v1099 = vrcp.pop %v1098
        %v1100 = vmul.f32 1.0, %v1099
        %v1101 = vtanh.pop %v1094
        %v1103 = vrot.slane %v1023, 7
        %v1105 = vmul.f32 %v1100, %v1103
        %1107 = vrot.lane.b32.xlu0 %v1101, 64
        %v1108 = vpop.permute.xlu0 %1107
        %v1110 = vmul.f32 %v1100, %v1108
        %1112 = vrot.lane.b32.xlu0 %v1110, 32
        %v1113 = vpop.permute.xlu0 %1112
        %v1115 = vadd.f32 %v1105, %v1113
        %v1116 = vtanh.pop %v1115
        %1118 = vrot.lane.b32.xlu0 %v1116, 64
        %v1119 = vpop.permute.xlu0 %1118
        %v1121 = vmul.f32 %v1100, %v1119
        %v1122 = vpack.c.bf16 %v1121, %v1121
        %v1124 = vunpack.c.l.b16 %v1122
        %v1125 = vpack.c.b16 %v1124, %v1124
        %1126 = vrot.lane.b32.xlu0 %v1125, 32
        %v1127 = vpop.permute.xlu0 %1126
        %vm1129 = vcmask 257027
        %vm1130 = vsmask.f32 3328
        %vm1131 = vmand %vm1129, %vm1130
        %v1132 = vld [vmem:[%s327] sm:$0x8]
        %v1133 = vsel %vm1131, %v1127, %v1132
        %1134 = vst [vmem:[%s327] sm:$0x8] %v1133
        %v1135 = vrot.slane %v1122, 3
        %1136 = vrot.lane.b32.xlu0 %v1135, 32
        %v1137 = vpop.permute.xlu0 %1136
        %v1139 = vsel %vm454, %v1137, 0
        %1141 = vmatprep.subr.bf16.mxu0 0
        %1142 = vmatpush1.bf16.msra.mxu0 %v506
        %1143 = vmatprep.subr.bf16.mxu0 0
        %1144 = vmatpush1.bf16.msra.mxu0 %v507
        %1145 = vmatprep.subr.bf16.mxu0 0
        %1146 = vmatpush1.bf16.msra.mxu0 0
        %1147 = vmatprep.subr.bf16.mxu0 0
        %1148 = vmatpush1.bf16.msra.mxu0 0
        %1149 = vmatprep.subr.bf16.mxu0 0
        %1150 = vmatpush1.bf16.msra.mxu0 0
        %1151 = vmatprep.subr.bf16.mxu0 0
        %1152 = vmatpush1.bf16.msra.mxu0 0
        %1153 = vmatprep.subr.bf16.mxu0 0
        %1154 = vmatpush1.bf16.msra.mxu0 0
        %1155 = vmatprep.subr.bf16.mxu0 0
        %1156 = vmatpush1.bf16.msra.mxu0 0
        %1157 = vmatprep.subr.bf16.mxu0 0
        %1158 = vmatpush1.bf16.msra.mxu0 0
        %1159 = vmatprep.subr.bf16.mxu0 0
        %1160 = vmatpush1.bf16.msra.mxu0 0
        %1161 = vmatprep.subr.bf16.mxu0 0
        %1162 = vmatpush1.bf16.msra.mxu0 0
        %1163 = vmatprep.subr.bf16.mxu0 0
        %1164 = vmatpush1.bf16.msra.mxu0 0
        %1165 = vmatprep.subr.bf16.mxu0 0
        %1166 = vmatpush1.bf16.msra.mxu0 0
        %1167 = vmatprep.subr.bf16.mxu0 0
        %1168 = vmatpush1.bf16.msra.mxu0 0
        %1169 = vmatprep.subr.bf16.mxu0 0
        %1170 = vmatpush1.bf16.msra.mxu0 0
        %1171 = vmatprep.subr.bf16.mxu0 0
        %1172 = vmatpush1.bf16.msra.mxu0 0
        %1173 = vmatprep.mubr.bf16.mxu0 0
        %1174 = vmatmul.mubr.bf16.gmra.mrb[0].mxu0 %v1139
        %v1175 = vpop.f32.mrb[0].mxu0
        %v1176 = vadd.f32 0.0, %v1175
        %v1177 = vpop.f32.mrb[0].mxu0
        %v1178 = vpop.f32.mrb[0].mxu0
        %v1179 = vpop.f32.mrb[0].mxu0
        %1180 = vdwg.mxu0
        %v1182 = vrot.slane %v1176, 1
        %v1184 = vadd.f32 %v493, %v1182
        %v1185 = vxor.u32 %v1184, 2147483648
        %v1186 = vmul.f32 %v1185, 1.442695
        %v1187 = vpow.pop %v1186
        %v1188 = vadd.f32 %v1187, 1.0
        %v1189 = vrcp.pop %v1188
        %v1190 = vmul.f32 1.0, %v1189
        %v1191 = vtanh.pop %v1184
        %v1193 = vrot.slane %v1115, 7
        %v1195 = vmul.f32 %v1190, %v1193
        %1197 = vrot.lane.b32.xlu0 %v1191, 64
        %v1198 = vpop.permute.xlu0 %1197
        %v1200 = vmul.f32 %v1190, %v1198
        %1202 = vrot.lane.b32.xlu0 %v1200, 32
        %v1203 = vpop.permute.xlu0 %1202
        %v1205 = vadd.f32 %v1195, %v1203
        %v1206 = vtanh.pop %v1205
        %1208 = vrot.lane.b32.xlu0 %v1206, 64
        %v1209 = vpop.permute.xlu0 %1208
        %v1211 = vmul.f32 %v1190, %v1209
        %v1212 = vpack.c.bf16 %v1211, %v1211
        %v1214 = vunpack.c.l.b16 %v1212
        %v1215 = vpack.c.b16 %v1214, %v1214
        %1216 = vrot.lane.b32.xlu0 %v1215, 32
        %v1217 = vpop.permute.xlu0 %1216
        %vm1219 = vsmask.f32 7950
        %vm1220 = vmand %vm1129, %vm1219
        %v1221 = vld [vmem:[%s327] sm:$0x8]
        %v1222 = vsel %vm1220, %v1217, %v1221
        %1223 = vst [vmem:[%s327] sm:$0x8] %v1222
        %v1224 = vld [vmem:[%s327] sm:$0xf]
        %v1225 = vld [vmem:[%s5] sm:$0xf]
        %v1226 = vld [vmem:[%s5 + $0x4] sm:$0xf]
        %v1227 = vld [vmem:[%s5 + $0x8] sm:$0xf]
        %v1228 = vld [vmem:[%s5 + $0xc] sm:$0xf]
        %v1229 = vld [vmem:[%s6] sm:$0xf]
        %v1230 = vld [vmem:[%s6 + $0x4] sm:$0xf]
        %v1231 = vld [vmem:[%s6 + $0x8] sm:$0xf]
        %v1232 = vld [vmem:[%s6 + $0xc] sm:$0xf]
        %v1233 = vld [vmem:[%s7] sm:$0x1]
        %v1235 = vlaneseq
        %v1236 = vshrl.u32 %v1235, 7
        %v1237 = vsub.s32 0, %v1236
        %v1238 = vrot.slane %v1233, %v1237
        %v1244 = vunpack.c.l.b16 %v1225
        %v1245 = vunpack.c.l.b16 %v1226
        %v1246 = vunpack.c.l.b16 %v1227
        %v1247 = vunpack.c.l.b16 %v1228
        %v1248 = vpack.c.b16 %v1245, %v1244
        %v1249 = vpack.c.b16 %v1247, %v1246
        %v1253 = vsel %vm454, %v1224, 0
        %1255 = vmatprep.subr.bf16.mxu0 0
        %1256 = vmatpush1.bf16.msra.mxu0 %v1248
        %1257 = vmatprep.subr.bf16.mxu0 0
        %1258 = vmatpush1.bf16.msra.mxu0 %v1249
        %1259 = vmatprep.subr.bf16.mxu0 0
        %1260 = vmatpush1.bf16.msra.mxu0 0
        %1261 = vmatprep.subr.bf16.mxu0 0
        %1262 = vmatpush1.bf16.msra.mxu0 0
        %1263 = vmatprep.subr.bf16.mxu0 0
        %1264 = vmatpush1.bf16.msra.mxu0 0
        %1265 = vmatprep.subr.bf16.mxu0 0
        %1266 = vmatpush1.bf16.msra.mxu0 0
        %1267 = vmatprep.subr.bf16.mxu0 0
        %1268 = vmatpush1.bf16.msra.mxu0 0
        %1269 = vmatprep.subr.bf16.mxu0 0
        %1270 = vmatpush1.bf16.msra.mxu0 0
        %1271 = vmatprep.subr.bf16.mxu0 0
        %1272 = vmatpush1.bf16.msra.mxu0 0
        %1273 = vmatprep.subr.bf16.mxu0 0
        %1274 = vmatpush1.bf16.msra.mxu0 0
        %1275 = vmatprep.subr.bf16.mxu0 0
        %1276 = vmatpush1.bf16.msra.mxu0 0
        %1277 = vmatprep.subr.bf16.mxu0 0
        %1278 = vmatpush1.bf16.msra.mxu0 0
        %1279 = vmatprep.subr.bf16.mxu0 0
        %1280 = vmatpush1.bf16.msra.mxu0 0
        %1281 = vmatprep.subr.bf16.mxu0 0
        %1282 = vmatpush1.bf16.msra.mxu0 0
        %1283 = vmatprep.subr.bf16.mxu0 0
        %1284 = vmatpush1.bf16.msra.mxu0 0
        %1285 = vmatprep.subr.bf16.mxu0 0
        %1286 = vmatpush1.bf16.msra.mxu0 0
        %1287 = vmatprep.mubr.bf16.mxu0 0
        %1288 = vmatmul.mubr.bf16.gmra.mrb[0].mxu0 %v1253
        %v1289 = vpop.f32.mrb[0].mxu0
        %v1290 = vadd.f32 %v1238, %v1289
        %v1291 = vpop.f32.mrb[0].mxu0
        %v1292 = vpop.f32.mrb[0].mxu0
        %v1293 = vpop.f32.mrb[0].mxu0
        %1294 = vdwg.mxu0
        %v1299 = vunpack.c.l.b16 %v1229
        %v1300 = vunpack.c.l.b16 %v1230
        %v1301 = vunpack.c.l.b16 %v1231
        %v1302 = vunpack.c.l.b16 %v1232
        %v1303 = vpack.c.b16 %v1300, %v1299
        %v1304 = vpack.c.b16 %v1302, %v1301
        %1307 = vmatprep.subr.bf16.mxu0 0
        %1308 = vmatpush1.bf16.msra.mxu0 %v1303
        %1309 = vmatprep.subr.bf16.mxu0 0
        %1310 = vmatpush1.bf16.msra.mxu0 %v1304
        %1311 = vmatprep.subr.bf16.mxu0 0
        %1312 = vmatpush1.bf16.msra.mxu0 0
        %1313 = vmatprep.subr.bf16.mxu0 0
        %1314 = vmatpush1.bf16.msra.mxu0 0
        %1315 = vmatprep.subr.bf16.mxu0 0
        %1316 = vmatpush1.bf16.msra.mxu0 0
        %1317 = vmatprep.subr.bf16.mxu0 0
        %1318 = vmatpush1.bf16.msra.mxu0 0
        %1319 = vmatprep.subr.bf16.mxu0 0
        %1320 = vmatpush1.bf16.msra.mxu0 0
        %1321 = vmatprep.subr.bf16.mxu0 0
        %1322 = vmatpush1.bf16.msra.mxu0 0
        %1323 = vmatprep.subr.bf16.mxu0 0
        %1324 = vmatpush1.bf16.msra.mxu0 0
        %1325 = vmatprep.subr.bf16.mxu0 0
        %1326 = vmatpush1.bf16.msra.mxu0 0
        %1327 = vmatprep.subr.bf16.mxu0 0
        %1328 = vmatpush1.bf16.msra.mxu0 0
        %1329 = vmatprep.subr.bf16.mxu0 0
        %1330 = vmatpush1.bf16.msra.mxu0 0
        %1331 = vmatprep.subr.bf16.mxu0 0
        %1332 = vmatpush1.bf16.msra.mxu0 0
        %1333 = vmatprep.subr.bf16.mxu0 0
        %1334 = vmatpush1.bf16.msra.mxu0 0
        %1335 = vmatprep.subr.bf16.mxu0 0
        %1336 = vmatpush1.bf16.msra.mxu0 0
        %1337 = vmatprep.subr.bf16.mxu0 0
        %1338 = vmatpush1.bf16.msra.mxu0 0
        %1339 = vmatprep.mubr.bf16.mxu0 0
        %1340 = vmatmul.mubr.bf16.gmra.mrb[0].mxu0 %v511
        %v1341 = vpop.f32.mrb[0].mxu0
        %v1342 = vadd.f32 0.0, %v1341
        %v1343 = vpop.f32.mrb[0].mxu0
        %v1344 = vpop.f32.mrb[0].mxu0
        %v1345 = vpop.f32.mrb[0].mxu0
        %1346 = vdwg.mxu0
        %v1347 = vadd.f32 %v1290, %v1342
        %v1348 = vxor.u32 %v1347, 2147483648
        %v1349 = vmul.f32 %v1348, 1.442695
        %v1350 = vpow.pop %v1349
        %v1351 = vadd.f32 %v1350, 1.0
        %v1352 = vrcp.pop %v1351
        %v1353 = vmul.f32 1.0, %v1352
        %v1354 = vtanh.pop %v1347
        %v1355 = vmul.f32 %v1353, 0.0
        %1357 = vrot.lane.b32.xlu0 %v1354, 64
        %v1358 = vpop.permute.xlu0 %1357
        %v1360 = vmul.f32 %v1353, %v1358
        %1362 = vrot.lane.b32.xlu0 %v1360, 32
        %v1363 = vpop.permute.xlu0 %1362
        %v1365 = vadd.f32 %v1355, %v1363
        %v1366 = vtanh.pop %v1365
        %1368 = vrot.lane.b32.xlu0 %v1366, 64
        %v1369 = vpop.permute.xlu0 %1368
        %v1371 = vmul.f32 %v1353, %v1369
        %v1372 = vpack.c.bf16 %v1371, %v1371
        %v1374 = vunpack.c.l.b16 %v1372
        %v1375 = vpack.c.b16 %v1374, %v1374
        %1376 = vrot.lane.b32.xlu0 %v1375, 32
        %v1377 = vpop.permute.xlu0 %1376
        %v1379 = vld [vmem:[%s334] sm:$0x1]
        %v1380 = vsel %vm587, %v1377, %v1379
        %1381 = vst [vmem:[%s334] sm:$0x1] %v1380
        %1382 = vrot.lane.b32.xlu0 %v1372, 32
        %v1383 = vpop.permute.xlu0 %1382
        %v1385 = vsel %vm454, %v1383, 0
        %1387 = vmatprep.subr.bf16.mxu0 0
        %1388 = vmatpush1.bf16.msra.mxu0 %v1303
        %1389 = vmatprep.subr.bf16.mxu0 0
        %1390 = vmatpush1.bf16.msra.mxu0 %v1304
        %1391 = vmatprep.subr.bf16.mxu0 0
        %1392 = vmatpush1.bf16.msra.mxu0 0
        %1393 = vmatprep.subr.bf16.mxu0 0
        %1394 = vmatpush1.bf16.msra.mxu0 0
        %1395 = vmatprep.subr.bf16.mxu0 0
        %1396 = vmatpush1.bf16.msra.mxu0 0
        %1397 = vmatprep.subr.bf16.mxu0 0
        %1398 = vmatpush1.bf16.msra.mxu0 0
        %1399 = vmatprep.subr.bf16.mxu0 0
        %1400 = vmatpush1.bf16.msra.mxu0 0
        %1401 = vmatprep.subr.bf16.mxu0 0
        %1402 = vmatpush1.bf16.msra.mxu0 0
        %1403 = vmatprep.subr.bf16.mxu0 0
        %1404 = vmatpush1.bf16.msra.mxu0 0
        %1405 = vmatprep.subr.bf16.mxu0 0
        %1406 = vmatpush1.bf16.msra.mxu0 0
        %1407 = vmatprep.subr.bf16.mxu0 0
        %1408 = vmatpush1.bf16.msra.mxu0 0
        %1409 = vmatprep.subr.bf16.mxu0 0
        %1410 = vmatpush1.bf16.msra.mxu0 0
        %1411 = vmatprep.subr.bf16.mxu0 0
        %1412 = vmatpush1.bf16.msra.mxu0 0
        %1413 = vmatprep.subr.bf16.mxu0 0
        %1414 = vmatpush1.bf16.msra.mxu0 0
        %1415 = vmatprep.subr.bf16.mxu0 0
        %1416 = vmatpush1.bf16.msra.mxu0 0
        %1417 = vmatprep.subr.bf16.mxu0 0
        %1418 = vmatpush1.bf16.msra.mxu0 0
        %1419 = vmatprep.mubr.bf16.mxu0 0
        %1420 = vmatmul.mubr.bf16.gmra.mrb[0].mxu0 %v1385
        %v1421 = vpop.f32.mrb[0].mxu0
        %v1422 = vadd.f32 0.0, %v1421
        %v1423 = vpop.f32.mrb[0].mxu0
        %v1424 = vpop.f32.mrb[0].mxu0
        %v1425 = vpop.f32.mrb[0].mxu0
        %1426 = vdwg.mxu0
        %v1428 = vrot.slane %v1422, 7
        %v1430 = vadd.f32 %v1290, %v1428
        %v1431 = vxor.u32 %v1430, 2147483648
        %v1432 = vmul.f32 %v1431, 1.442695
        %v1433 = vpow.pop %v1432
        %v1434 = vadd.f32 %v1433, 1.0
        %v1435 = vrcp.pop %v1434
        %v1436 = vmul.f32 1.0, %v1435
        %v1437 = vtanh.pop %v1430
        %v1439 = vrot.slane %v1365, 7
        %v1441 = vmul.f32 %v1436, %v1439
        %1443 = vrot.lane.b32.xlu0 %v1437, 64
        %v1444 = vpop.permute.xlu0 %1443
        %v1446 = vmul.f32 %v1436, %v1444
        %1448 = vrot.lane.b32.xlu0 %v1446, 32
        %v1449 = vpop.permute.xlu0 %1448
        %v1451 = vadd.f32 %v1441, %v1449
        %v1452 = vtanh.pop %v1451
        %1454 = vrot.lane.b32.xlu0 %v1452, 64
        %v1455 = vpop.permute.xlu0 %1454
        %v1457 = vmul.f32 %v1436, %v1455
        %v1458 = vpack.c.bf16 %v1457, %v1457
        %v1460 = vunpack.c.l.b16 %v1458
        %v1461 = vpack.c.b16 %v1460, %v1460
        %1462 = vrot.lane.b32.xlu0 %v1461, 32
        %v1463 = vpop.permute.xlu0 %1462
        %v1465 = vld [vmem:[%s334] sm:$0x1]
        %v1466 = vsel %vm675, %v1463, %v1465
        %1467 = vst [vmem:[%s334] sm:$0x1] %v1466
        %v1469 = vshrl.u32 %v1458, 16
        %1471 = vrot.lane.b32.xlu0 %v1469, 32
        %v1472 = vpop.permute.xlu0 %1471
        %v1474 = vsel %vm454, %v1472, 0
        %1476 = vmatprep.subr.bf16.mxu0 0
        %1477 = vmatpush1.bf16.msra.mxu0 %v1303
        %1478 = vmatprep.subr.bf16.mxu0 0
        %1479 = vmatpush1.bf16.msra.mxu0 %v1304
        %1480 = vmatprep.subr.bf16.mxu0 0
        %1481 = vmatpush1.bf16.msra.mxu0 0
        %1482 = vmatprep.subr.bf16.mxu0 0
        %1483 = vmatpush1.bf16.msra.mxu0 0
        %1484 = vmatprep.subr.bf16.mxu0 0
        %1485 = vmatpush1.bf16.msra.mxu0 0
        %1486 = vmatprep.subr.bf16.mxu0 0
        %1487 = vmatpush1.bf16.msra.mxu0 0
        %1488 = vmatprep.subr.bf16.mxu0 0
        %1489 = vmatpush1.bf16.msra.mxu0 0
        %1490 = vmatprep.subr.bf16.mxu0 0
        %1491 = vmatpush1.bf16.msra.mxu0 0
        %1492 = vmatprep.subr.bf16.mxu0 0
        %1493 = vmatpush1.bf16.msra.mxu0 0
        %1494 = vmatprep.subr.bf16.mxu0 0
        %1495 = vmatpush1.bf16.msra.mxu0 0
        %1496 = vmatprep.subr.bf16.mxu0 0
        %1497 = vmatpush1.bf16.msra.mxu0 0
        %1498 = vmatprep.subr.bf16.mxu0 0
        %1499 = vmatpush1.bf16.msra.mxu0 0
        %1500 = vmatprep.subr.bf16.mxu0 0
        %1501 = vmatpush1.bf16.msra.mxu0 0
        %1502 = vmatprep.subr.bf16.mxu0 0
        %1503 = vmatpush1.bf16.msra.mxu0 0
        %1504 = vmatprep.subr.bf16.mxu0 0
        %1505 = vmatpush1.bf16.msra.mxu0 0
        %1506 = vmatprep.subr.bf16.mxu0 0
        %1507 = vmatpush1.bf16.msra.mxu0 0
        %1508 = vmatprep.mubr.bf16.mxu0 0
        %1509 = vmatmul.mubr.bf16.gmra.mrb[0].mxu0 %v1474
        %v1510 = vpop.f32.mrb[0].mxu0
        %v1511 = vadd.f32 0.0, %v1510
        %v1512 = vpop.f32.mrb[0].mxu0
        %v1513 = vpop.f32.mrb[0].mxu0
        %v1514 = vpop.f32.mrb[0].mxu0
        %1515 = vdwg.mxu0
        %v1517 = vrot.slane %v1511, 6
        %v1519 = vadd.f32 %v1290, %v1517
        %v1520 = vxor.u32 %v1519, 2147483648
        %v1521 = vmul.f32 %v1520, 1.442695
        %v1522 = vpow.pop %v1521
        %v1523 = vadd.f32 %v1522, 1.0
        %v1524 = vrcp.pop %v1523
        %v1525 = vmul.f32 1.0, %v1524
        %v1526 = vtanh.pop %v1519
        %v1528 = vrot.slane %v1451, 7
        %v1530 = vmul.f32 %v1525, %v1528
        %1532 = vrot.lane.b32.xlu0 %v1526, 64
        %v1533 = vpop.permute.xlu0 %1532
        %v1535 = vmul.f32 %v1525, %v1533
        %1537 = vrot.lane.b32.xlu0 %v1535, 32
        %v1538 = vpop.permute.xlu0 %1537
        %v1540 = vadd.f32 %v1530, %v1538
        %v1541 = vtanh.pop %v1540
        %1543 = vrot.lane.b32.xlu0 %v1541, 64
        %v1544 = vpop.permute.xlu0 %1543
        %v1546 = vmul.f32 %v1525, %v1544
        %v1547 = vpack.c.bf16 %v1546, %v1546
        %v1549 = vunpack.c.l.b16 %v1547
        %v1550 = vpack.c.b16 %v1549, %v1549
        %1551 = vrot.lane.b32.xlu0 %v1550, 32
        %v1552 = vpop.permute.xlu0 %1551
        %v1554 = vld [vmem:[%s334] sm:$0x2]
        %v1555 = vsel %vm767, %v1552, %v1554
        %1556 = vst [vmem:[%s334] sm:$0x2] %v1555
        %v1557 = vrot.slane %v1547, 1
        %1558 = vrot.lane.b32.xlu0 %v1557, 32
        %v1559 = vpop.permute.xlu0 %1558
        %v1561 = vsel %vm454, %v1559, 0
        %1563 = vmatprep.subr.bf16.mxu0 0
        %1564 = vmatpush1.bf16.msra.mxu0 %v1303
        %1565 = vmatprep.subr.bf16.mxu0 0
        %1566 = vmatpush1.bf16.msra.mxu0 %v1304
        %1567 = vmatprep.subr.bf16.mxu0 0
        %1568 = vmatpush1.bf16.msra.mxu0 0
        %1569 = vmatprep.subr.bf16.mxu0 0
        %1570 = vmatpush1.bf16.msra.mxu0 0
        %1571 = vmatprep.subr.bf16.mxu0 0
        %1572 = vmatpush1.bf16.msra.mxu0 0
        %1573 = vmatprep.subr.bf16.mxu0 0
        %1574 = vmatpush1.bf16.msra.mxu0 0
        %1575 = vmatprep.subr.bf16.mxu0 0
        %1576 = vmatpush1.bf16.msra.mxu0 0
        %1577 = vmatprep.subr.bf16.mxu0 0
        %1578 = vmatpush1.bf16.msra.mxu0 0
        %1579 = vmatprep.subr.bf16.mxu0 0
        %1580 = vmatpush1.bf16.msra.mxu0 0
        %1581 = vmatprep.subr.bf16.mxu0 0
        %1582 = vmatpush1.bf16.msra.mxu0 0
        %1583 = vmatprep.subr.bf16.mxu0 0
        %1584 = vmatpush1.bf16.msra.mxu0 0
        %1585 = vmatprep.subr.bf16.mxu0 0
        %1586 = vmatpush1.bf16.msra.mxu0 0
        %1587 = vmatprep.subr.bf16.mxu0 0
        %1588 = vmatpush1.bf16.msra.mxu0 0
        %1589 = vmatprep.subr.bf16.mxu0 0
        %1590 = vmatpush1.bf16.msra.mxu0 0
        %1591 = vmatprep.subr.bf16.mxu0 0
        %1592 = vmatpush1.bf16.msra.mxu0 0
        %1593 = vmatprep.subr.bf16.mxu0 0
        %1594 = vmatpush1.bf16.msra.mxu0 0
        %1595 = vmatprep.mubr.bf16.mxu0 0
        %1596 = vmatmul.mubr.bf16.gmra.mrb[0].mxu0 %v1561
        %v1597 = vpop.f32.mrb[0].mxu0
        %v1598 = vadd.f32 0.0, %v1597
        %v1599 = vpop.f32.mrb[0].mxu0
        %v1600 = vpop.f32.mrb[0].mxu0
        %v1601 = vpop.f32.mrb[0].mxu0
        %1602 = vdwg.mxu0
        %v1604 = vrot.slane %v1598, 5
        %v1606 = vadd.f32 %v1290, %v1604
        %v1607 = vxor.u32 %v1606, 2147483648
        %v1608 = vmul.f32 %v1607, 1.442695
        %v1609 = vpow.pop %v1608
        %v1610 = vadd.f32 %v1609, 1.0
        %v1611 = vrcp.pop %v1610
        %v1612 = vmul.f32 1.0, %v1611
        %v1613 = vtanh.pop %v1606
        %v1615 = vrot.slane %v1540, 7
        %v1617 = vmul.f32 %v1612, %v1615
        %1619 = vrot.lane.b32.xlu0 %v1613, 64
        %v1620 = vpop.permute.xlu0 %1619
        %v1622 = vmul.f32 %v1612, %v1620
        %1624 = vrot.lane.b32.xlu0 %v1622, 32
        %v1625 = vpop.permute.xlu0 %1624
        %v1627 = vadd.f32 %v1617, %v1625
        %v1628 = vtanh.pop %v1627
        %1630 = vrot.lane.b32.xlu0 %v1628, 64
        %v1631 = vpop.permute.xlu0 %1630
        %v1633 = vmul.f32 %v1612, %v1631
        %v1634 = vpack.c.bf16 %v1633, %v1633
        %v1636 = vunpack.c.l.b16 %v1634
        %v1637 = vpack.c.b16 %v1636, %v1636
        %1638 = vrot.lane.b32.xlu0 %v1637, 32
        %v1639 = vpop.permute.xlu0 %1638
        %v1641 = vld [vmem:[%s334] sm:$0x2]
        %v1642 = vsel %vm856, %v1639, %v1641
        %1643 = vst [vmem:[%s334] sm:$0x2] %v1642
        %v1645 = vshrl.u32 %v1634, 16
        %v1647 = vrot.slane %v1645, 1
        %1648 = vrot.lane.b32.xlu0 %v1647, 32
        %v1649 = vpop.permute.xlu0 %1648
        %v1651 = vsel %vm454, %v1649, 0
        %1653 = vmatprep.subr.bf16.mxu0 0
        %1654 = vmatpush1.bf16.msra.mxu0 %v1303
        %1655 = vmatprep.subr.bf16.mxu0 0
        %1656 = vmatpush1.bf16.msra.mxu0 %v1304
        %1657 = vmatprep.subr.bf16.mxu0 0
        %1658 = vmatpush1.bf16.msra.mxu0 0
        %1659 = vmatprep.subr.bf16.mxu0 0
        %1660 = vmatpush1.bf16.msra.mxu0 0
        %1661 = vmatprep.subr.bf16.mxu0 0
        %1662 = vmatpush1.bf16.msra.mxu0 0
        %1663 = vmatprep.subr.bf16.mxu0 0
        %1664 = vmatpush1.bf16.msra.mxu0 0
        %1665 = vmatprep.subr.bf16.mxu0 0
        %1666 = vmatpush1.bf16.msra.mxu0 0
        %1667 = vmatprep.subr.bf16.mxu0 0
        %1668 = vmatpush1.bf16.msra.mxu0 0
        %1669 = vmatprep.subr.bf16.mxu0 0
        %1670 = vmatpush1.bf16.msra.mxu0 0
        %1671 = vmatprep.subr.bf16.mxu0 0
        %1672 = vmatpush1.bf16.msra.mxu0 0
        %1673 = vmatprep.subr.bf16.mxu0 0
        %1674 = vmatpush1.bf16.msra.mxu0 0
        %1675 = vmatprep.subr.bf16.mxu0 0
        %1676 = vmatpush1.bf16.msra.mxu0 0
        %1677 = vmatprep.subr.bf16.mxu0 0
        %1678 = vmatpush1.bf16.msra.mxu0 0
        %1679 = vmatprep.subr.bf16.mxu0 0
        %1680 = vmatpush1.bf16.msra.mxu0 0
        %1681 = vmatprep.subr.bf16.mxu0 0
        %1682 = vmatpush1.bf16.msra.mxu0 0
        %1683 = vmatprep.subr.bf16.mxu0 0
        %1684 = vmatpush1.bf16.msra.mxu0 0
        %1685 = vmatprep.mubr.bf16.mxu0 0
        %1686 = vmatmul.mubr.bf16.gmra.mrb[0].mxu0 %v1651
        %v1687 = vpop.f32.mrb[0].mxu0
        %v1688 = vadd.f32 0.0, %v1687
        %v1689 = vpop.f32.mrb[0].mxu0
        %v1690 = vpop.f32.mrb[0].mxu0
        %v1691 = vpop.f32.mrb[0].mxu0
        %1692 = vdwg.mxu0
        %v1694 = vrot.slane %v1688, 4
        %v1696 = vadd.f32 %v1290, %v1694
        %v1697 = vxor.u32 %v1696, 2147483648
        %v1698 = vmul.f32 %v1697, 1.442695
        %v1699 = vpow.pop %v1698
        %v1700 = vadd.f32 %v1699, 1.0
        %v1701 = vrcp.pop %v1700
        %v1702 = vmul.f32 1.0, %v1701
        %v1703 = vtanh.pop %v1696
        %v1705 = vrot.slane %v1627, 7
        %v1707 = vmul.f32 %v1702, %v1705
        %1709 = vrot.lane.b32.xlu0 %v1703, 64
        %v1710 = vpop.permute.xlu0 %1709
        %v1712 = vmul.f32 %v1702, %v1710
        %1714 = vrot.lane.b32.xlu0 %v1712, 32
        %v1715 = vpop.permute.xlu0 %1714
        %v1717 = vadd.f32 %v1707, %v1715
        %v1718 = vtanh.pop %v1717
        %1720 = vrot.lane.b32.xlu0 %v1718, 64
        %v1721 = vpop.permute.xlu0 %1720
        %v1723 = vmul.f32 %v1702, %v1721
        %v1724 = vpack.c.bf16 %v1723, %v1723
        %v1726 = vunpack.c.l.b16 %v1724
        %v1727 = vpack.c.b16 %v1726, %v1726
        %1728 = vrot.lane.b32.xlu0 %v1727, 32
        %v1729 = vpop.permute.xlu0 %1728
        %v1731 = vld [vmem:[%s334] sm:$0x4]
        %v1732 = vsel %vm949, %v1729, %v1731
        %1733 = vst [vmem:[%s334] sm:$0x4] %v1732
        %v1734 = vrot.slane %v1724, 2
        %1735 = vrot.lane.b32.xlu0 %v1734, 32
        %v1736 = vpop.permute.xlu0 %1735
        %v1738 = vsel %vm454, %v1736, 0
        %1740 = vmatprep.subr.bf16.mxu0 0
        %1741 = vmatpush1.bf16.msra.mxu0 %v1303
        %1742 = vmatprep.subr.bf16.mxu0 0
        %1743 = vmatpush1.bf16.msra.mxu0 %v1304
        %1744 = vmatprep.subr.bf16.mxu0 0
        %1745 = vmatpush1.bf16.msra.mxu0 0
        %1746 = vmatprep.subr.bf16.mxu0 0
        %1747 = vmatpush1.bf16.msra.mxu0 0
        %1748 = vmatprep.subr.bf16.mxu0 0
        %1749 = vmatpush1.bf16.msra.mxu0 0
        %1750 = vmatprep.subr.bf16.mxu0 0
        %1751 = vmatpush1.bf16.msra.mxu0 0
        %1752 = vmatprep.subr.bf16.mxu0 0
        %1753 = vmatpush1.bf16.msra.mxu0 0
        %1754 = vmatprep.subr.bf16.mxu0 0
        %1755 = vmatpush1.bf16.msra.mxu0 0
        %1756 = vmatprep.subr.bf16.mxu0 0
        %1757 = vmatpush1.bf16.msra.mxu0 0
        %1758 = vmatprep.subr.bf16.mxu0 0
        %1759 = vmatpush1.bf16.msra.mxu0 0
        %1760 = vmatprep.subr.bf16.mxu0 0
        %1761 = vmatpush1.bf16.msra.mxu0 0
        %1762 = vmatprep.subr.bf16.mxu0 0
        %1763 = vmatpush1.bf16.msra.mxu0 0
        %1764 = vmatprep.subr.bf16.mxu0 0
        %1765 = vmatpush1.bf16.msra.mxu0 0
        %1766 = vmatprep.subr.bf16.mxu0 0
        %1767 = vmatpush1.bf16.msra.mxu0 0
        %1768 = vmatprep.subr.bf16.mxu0 0
        %1769 = vmatpush1.bf16.msra.mxu0 0
        %1770 = vmatprep.subr.bf16.mxu0 0
        %1771 = vmatpush1.bf16.msra.mxu0 0
        %1772 = vmatprep.mubr.bf16.mxu0 0
        %1773 = vmatmul.mubr.bf16.gmra.mrb[0].mxu0 %v1738
        %v1774 = vpop.f32.mrb[0].mxu0
        %v1775 = vadd.f32 0.0, %v1774
        %v1776 = vpop.f32.mrb[0].mxu0
        %v1777 = vpop.f32.mrb[0].mxu0
        %v1778 = vpop.f32.mrb[0].mxu0
        %1779 = vdwg.mxu0
        %v1781 = vrot.slane %v1775, 3
        %v1783 = vadd.f32 %v1290, %v1781
        %v1784 = vxor.u32 %v1783, 2147483648
        %v1785 = vmul.f32 %v1784, 1.442695
        %v1786 = vpow.pop %v1785
        %v1787 = vadd.f32 %v1786, 1.0
        %v1788 = vrcp.pop %v1787
        %v1789 = vmul.f32 1.0, %v1788
        %v1790 = vtanh.pop %v1783
        %v1792 = vrot.slane %v1717, 7
        %v1794 = vmul.f32 %v1789, %v1792
        %1796 = vrot.lane.b32.xlu0 %v1790, 64
        %v1797 = vpop.permute.xlu0 %1796
        %v1799 = vmul.f32 %v1789, %v1797
        %1801 = vrot.lane.b32.xlu0 %v1799, 32
        %v1802 = vpop.permute.xlu0 %1801
        %v1804 = vadd.f32 %v1794, %v1802
        %v1805 = vtanh.pop %v1804
        %1807 = vrot.lane.b32.xlu0 %v1805, 64
        %v1808 = vpop.permute.xlu0 %1807
        %v1810 = vmul.f32 %v1789, %v1808
        %v1811 = vpack.c.bf16 %v1810, %v1810
        %v1813 = vunpack.c.l.b16 %v1811
        %v1814 = vpack.c.b16 %v1813, %v1813
        %1815 = vrot.lane.b32.xlu0 %v1814, 32
        %v1816 = vpop.permute.xlu0 %1815
        %v1818 = vld [vmem:[%s334] sm:$0x4]
        %v1819 = vsel %vm1038, %v1816, %v1818
        %1820 = vst [vmem:[%s334] sm:$0x4] %v1819
        %v1822 = vshrl.u32 %v1811, 16
        %v1824 = vrot.slane %v1822, 2
        %1825 = vrot.lane.b32.xlu0 %v1824, 32
        %v1826 = vpop.permute.xlu0 %1825
        %v1828 = vsel %vm454, %v1826, 0
        %1830 = vmatprep.subr.bf16.mxu0 0
        %1831 = vmatpush1.bf16.msra.mxu0 %v1303
        %1832 = vmatprep.subr.bf16.mxu0 0
        %1833 = vmatpush1.bf16.msra.mxu0 %v1304
        %1834 = vmatprep.subr.bf16.mxu0 0
        %1835 = vmatpush1.bf16.msra.mxu0 0
        %1836 = vmatprep.subr.bf16.mxu0 0
        %1837 = vmatpush1.bf16.msra.mxu0 0
        %1838 = vmatprep.subr.bf16.mxu0 0
        %1839 = vmatpush1.bf16.msra.mxu0 0
        %1840 = vmatprep.subr.bf16.mxu0 0
        %1841 = vmatpush1.bf16.msra.mxu0 0
        %1842 = vmatprep.subr.bf16.mxu0 0
        %1843 = vmatpush1.bf16.msra.mxu0 0
        %1844 = vmatprep.subr.bf16.mxu0 0
        %1845 = vmatpush1.bf16.msra.mxu0 0
        %1846 = vmatprep.subr.bf16.mxu0 0
        %1847 = vmatpush1.bf16.msra.mxu0 0
        %1848 = vmatprep.subr.bf16.mxu0 0
        %1849 = vmatpush1.bf16.msra.mxu0 0
        %1850 = vmatprep.subr.bf16.mxu0 0
        %1851 = vmatpush1.bf16.msra.mxu0 0
        %1852 = vmatprep.subr.bf16.mxu0 0
        %1853 = vmatpush1.bf16.msra.mxu0 0
        %1854 = vmatprep.subr.bf16.mxu0 0
        %1855 = vmatpush1.bf16.msra.mxu0 0
        %1856 = vmatprep.subr.bf16.mxu0 0
        %1857 = vmatpush1.bf16.msra.mxu0 0
        %1858 = vmatprep.subr.bf16.mxu0 0
        %1859 = vmatpush1.bf16.msra.mxu0 0
        %1860 = vmatprep.subr.bf16.mxu0 0
        %1861 = vmatpush1.bf16.msra.mxu0 0
        %1862 = vmatprep.mubr.bf16.mxu0 0
        %1863 = vmatmul.mubr.bf16.gmra.mrb[0].mxu0 %v1828
        %v1864 = vpop.f32.mrb[0].mxu0
        %v1865 = vadd.f32 0.0, %v1864
        %v1866 = vpop.f32.mrb[0].mxu0
        %v1867 = vpop.f32.mrb[0].mxu0
        %v1868 = vpop.f32.mrb[0].mxu0
        %1869 = vdwg.mxu0
        %v1871 = vrot.slane %v1865, 2
        %v1873 = vadd.f32 %v1290, %v1871
        %v1874 = vxor.u32 %v1873, 2147483648
        %v1875 = vmul.f32 %v1874, 1.442695
        %v1876 = vpow.pop %v1875
        %v1877 = vadd.f32 %v1876, 1.0
        %v1878 = vrcp.pop %v1877
        %v1879 = vmul.f32 1.0, %v1878
        %v1880 = vtanh.pop %v1873
        %v1882 = vrot.slane %v1804, 7
        %v1884 = vmul.f32 %v1879, %v1882
        %1886 = vrot.lane.b32.xlu0 %v1880, 64
        %v1887 = vpop.permute.xlu0 %1886
        %v1889 = vmul.f32 %v1879, %v1887
        %1891 = vrot.lane.b32.xlu0 %v1889, 32
        %v1892 = vpop.permute.xlu0 %1891
        %v1894 = vadd.f32 %v1884, %v1892
        %v1895 = vtanh.pop %v1894
        %1897 = vrot.lane.b32.xlu0 %v1895, 64
        %v1898 = vpop.permute.xlu0 %1897
        %v1900 = vmul.f32 %v1879, %v1898
        %v1901 = vpack.c.bf16 %v1900, %v1900
        %v1903 = vunpack.c.l.b16 %v1901
        %v1904 = vpack.c.b16 %v1903, %v1903
        %1905 = vrot.lane.b32.xlu0 %v1904, 32
        %v1906 = vpop.permute.xlu0 %1905
        %v1908 = vld [vmem:[%s334] sm:$0x8]
        %v1909 = vsel %vm1131, %v1906, %v1908
        %1910 = vst [vmem:[%s334] sm:$0x8] %v1909
        %v1911 = vrot.slane %v1901, 3
        %1912 = vrot.lane.b32.xlu0 %v1911, 32
        %v1913 = vpop.permute.xlu0 %1912
        %v1915 = vsel %vm454, %v1913, 0
        %1917 = vmatprep.subr.bf16.mxu0 0
        %1918 = vmatpush1.bf16.msra.mxu0 %v1303
        %1919 = vmatprep.subr.bf16.mxu0 0
        %1920 = vmatpush1.bf16.msra.mxu0 %v1304
        %1921 = vmatprep.subr.bf16.mxu0 0
        %1922 = vmatpush1.bf16.msra.mxu0 0
        %1923 = vmatprep.subr.bf16.mxu0 0
        %1924 = vmatpush1.bf16.msra.mxu0 0
        %1925 = vmatprep.subr.bf16.mxu0 0
        %1926 = vmatpush1.bf16.msra.mxu0 0
        %1927 = vmatprep.subr.bf16.mxu0 0
        %1928 = vmatpush1.bf16.msra.mxu0 0
        %1929 = vmatprep.subr.bf16.mxu0 0
        %1930 = vmatpush1.bf16.msra.mxu0 0
        %1931 = vmatprep.subr.bf16.mxu0 0
        %1932 = vmatpush1.bf16.msra.mxu0 0
        %1933 = vmatprep.subr.bf16.mxu0 0
        %1934 = vmatpush1.bf16.msra.mxu0 0
        %1935 = vmatprep.subr.bf16.mxu0 0
        %1936 = vmatpush1.bf16.msra.mxu0 0
        %1937 = vmatprep.subr.bf16.mxu0 0
        %1938 = vmatpush1.bf16.msra.mxu0 0
        %1939 = vmatprep.subr.bf16.mxu0 0
        %1940 = vmatpush1.bf16.msra.mxu0 0
        %1941 = vmatprep.subr.bf16.mxu0 0
        %1942 = vmatpush1.bf16.msra.mxu0 0
        %1943 = vmatprep.subr.bf16.mxu0 0
        %1944 = vmatpush1.bf16.msra.mxu0 0
        %1945 = vmatprep.subr.bf16.mxu0 0
        %1946 = vmatpush1.bf16.msra.mxu0 0
        %1947 = vmatprep.subr.bf16.mxu0 0
        %1948 = vmatpush1.bf16.msra.mxu0 0
        %1949 = vmatprep.mubr.bf16.mxu0 0
        %1950 = vmatmul.mubr.bf16.gmra.mrb[0].mxu0 %v1915
        %v1951 = vpop.f32.mrb[0].mxu0
        %v1952 = vadd.f32 0.0, %v1951
        %v1953 = vpop.f32.mrb[0].mxu0
        %v1954 = vpop.f32.mrb[0].mxu0
        %v1955 = vpop.f32.mrb[0].mxu0
        %1956 = vdwg.mxu0
        %v1958 = vrot.slane %v1952, 1
        %v1960 = vadd.f32 %v1290, %v1958
        %v1961 = vxor.u32 %v1960, 2147483648
        %v1962 = vmul.f32 %v1961, 1.442695
        %v1963 = vpow.pop %v1962
        %v1964 = vadd.f32 %v1963, 1.0
        %v1965 = vrcp.pop %v1964
        %v1966 = vmul.f32 1.0, %v1965
        %v1967 = vtanh.pop %v1960
        %v1969 = vrot.slane %v1894, 7
        %v1971 = vmul.f32 %v1966, %v1969
        %1973 = vrot.lane.b32.xlu0 %v1967, 64
        %v1974 = vpop.permute.xlu0 %1973
        %v1976 = vmul.f32 %v1966, %v1974
        %1978 = vrot.lane.b32.xlu0 %v1976, 32
        %v1979 = vpop.permute.xlu0 %1978
        %v1981 = vadd.f32 %v1971, %v1979
        %v1982 = vtanh.pop %v1981
        %1984 = vrot.lane.b32.xlu0 %v1982, 64
        %v1985 = vpop.permute.xlu0 %1984
        %v1987 = vmul.f32 %v1966, %v1985
        %v1988 = vpack.c.bf16 %v1987, %v1987
        %v1990 = vunpack.c.l.b16 %v1988
        %v1991 = vpack.c.b16 %v1990, %v1990
        %1992 = vrot.lane.b32.xlu0 %v1991, 32
        %v1993 = vpop.permute.xlu0 %1992
        %v1995 = vld [vmem:[%s334] sm:$0x8]
        %v1996 = vsel %vm1220, %v1993, %v1995
        %1997 = vst [vmem:[%s334] sm:$0x8] %v1996
        %s1998 = sand.u32 %s208, 1
        %s1999 = scalar_lea.sflag [#allocation3], %s1998
        %s2000 = sand.u32 %s208, 1
        %s2001 = smul.addr %s2000, 4
        %s2002 = scalar_lea.vmem [#allocation2], %s2001
        %s2003 = sand.u32 %s234, 1
        %s2004 = scalar_lea.sflag [#allocation5], %s2003
        %s2005 = sand.u32 %s234, 1
        %s2006 = smul.addr %s2005, 4
        %s2007 = scalar_lea.vmem [#allocation4], %s2006
        // Predicated region
        $region53: #{tpu_custom_call.1} parent=51 // pred_check
          %p2008 = pneg %p218
        $region54: #{tpu_custom_call.1} parent=51 // pred_check_branch
          %2010 = sbr.rel (%p2008) target = $region56
        $region55: #{tpu_custom_call.1} parent=51 // pred_region
          %s2012 = ssub.s32 64, 64
          %2013 = vsyncadd %s1999, %s2012
          %s2014 = smul.addr %s27, 64
          %s2015 = scalar_lea.hbm %s8, %s2014
          %s2017 = sshll.u32 %s2002, 4
          %s2018 = int_to_ptr.vmem [resolvable:$true] %s2017
          %2020 = dma.vmem_to_hbm [thread:$0]  %s2018, 64, %s2015, %s1999
        $region56: #{tpu_custom_call.1} parent=51 // pred_fallthru
          _
        // Predicated region
        $region57: #{tpu_custom_call.1} parent=51 // pred_check
          %p2021 = pneg %p244
        $region58: #{tpu_custom_call.1} parent=51 // pred_check_branch
          %2023 = sbr.rel (%p2021) target = $region60
        $region59: #{tpu_custom_call.1} parent=51 // pred_region
          %s2025 = ssub.s32 64, 64
          %2026 = vsyncadd %s2004, %s2025
          %s2027 = smul.addr %s27, 64
          %s2028 = scalar_lea.hbm %s9, %s2027
          %s2030 = sshll.u32 %s2007, 4
          %s2031 = int_to_ptr.vmem [resolvable:$true] %s2030
          %2033 = dma.vmem_to_hbm [thread:$0]  %s2031, 64, %s2028, %s2004
        $region60: #{tpu_custom_call.1} parent=51 // pred_fallthru
          _
      $region52: #{tpu_custom_call.1} parent=5 // pred_fallthru
        _
      %p2034 = scmp.le.s32.totalorder 2, %s22
      // Predicated region
      $region61: #{tpu_custom_call.1} parent=5 // pred_check
        %p2035 = pneg %p2034
      $region62: #{tpu_custom_call.1} parent=5 // pred_check_branch
        %2037 = sbr.rel (%p2035) target = $region64
      $region63: #{tpu_custom_call.1} parent=5 // pred_region
        %s2038 = ssub.s32 %s22, 2
        // Predicated region
        $region65: #{tpu_custom_call.1} parent=63 // pred_check
          %p2039 = pneg %p224
        $region66: #{tpu_custom_call.1} parent=63 // pred_check_branch
          %2041 = sbr.rel (%p2039) target = $region68
        $region67: #{tpu_custom_call.1} parent=63 // pred_region
          %s2042 = sand.u32 %s209, 1
          %s2043 = scalar_lea.sflag [#allocation3], %s2042
          %s2044 = sand.u32 %s209, 1
          %s2045 = smul.addr %s2044, 4
          %s2046 = scalar_lea.vmem [#allocation2], %s2045
          %2047 = dma.done %s2043, 64
        $region68: #{tpu_custom_call.1} parent=63 // pred_fallthru
          _
        // Predicated region
        $region69: #{tpu_custom_call.1} parent=63 // pred_check
          %p2048 = pneg %p250
        $region70: #{tpu_custom_call.1} parent=63 // pred_check_branch
          %2050 = sbr.rel (%p2048) target = $region72
        $region71: #{tpu_custom_call.1} parent=63 // pred_region
          %s2051 = sand.u32 %s235, 1
          %s2052 = scalar_lea.sflag [#allocation5], %s2051
          %s2053 = sand.u32 %s235, 1
          %s2054 = smul.addr %s2053, 4
          %s2055 = scalar_lea.vmem [#allocation4], %s2054
          %2056 = dma.done %s2052, 64
        $region72: #{tpu_custom_call.1} parent=63 // pred_fallthru
          _
      $region64: #{tpu_custom_call.1} parent=5 // pred_fallthru
        _
    $region6: #{tpu_custom_call.1} parent=1 // loop_footer
      %s26 = sadd.s32 1, %s22
    $region7: #{tpu_custom_call.1} parent=1 // loop_footer_branch
      %21 = sbr.rel target = $region3
    $region8: #{tpu_custom_call.1} parent=1 // loop_exit
      _
    %2057 = vsyncpa [#allocation3], 1
    %s2058 = scalar_lea.sflag [#allocation3], 1
    %2059 = vsyncpa %s2058, 1
    %2060 = vsyncpa [#allocation5], 1
    %s2061 = scalar_lea.sflag [#allocation5], 1
    %2062 = vsyncpa %s2061, 1

</llo_original>
